<compile_context>
chip_gen: v7x
topology: tpu7x:2x2x1
jax: 0.10.0
libtpu: 0.0.40
codegen_flags: <defaults>
</compile_context>

<pallas_src>
import functools
import math

import jax
import jax.numpy as jnp
from jax.experimental import pallas as pl
from jax.experimental.pallas import tpu as pltpu


def _conv_rows(slab, w2, KH, T):
    """acc[t, w*Cout + co] = sum_kh slab[0, t+kh, :] @ W2[kh]  (f32 accumulate)."""
    acc = None
    for kh in range(KH):
        part = jnp.dot(slab[0, kh:kh + T, :], w2[kh],
                       preferred_element_type=jnp.float32)
        acc = part if acc is None else acc + part
    return acc


def _stats_kernel(slab_ref, w2_ref, psum_ref, psq_ref, *,
                  KH, T, G_h, H_out, H_pad):
    """Per-tile partial column sums / sums-of-squares of the conv output.

    Outputs are lane-dense (1, W_out*Cout) rows; the (w, co) -> co fold is a
    tiny XLA reduction outside the kernel.
    """
    acc = _conv_rows(slab_ref[...], w2_ref[...], KH, T)
    if H_pad != H_out:
        # Only the last H-tile of each image is ragged; mask its padded rows.
        gh = pl.program_id(0) % G_h
        n_valid = jnp.minimum(H_out - gh * T, T)
        rows = jax.lax.broadcasted_iota(jnp.int32, acc.shape, 0)
        acc = jnp.where(rows < n_valid, acc, 0.0)
    psum_ref[...] = jnp.sum(acc, axis=0, keepdims=True)[None]        # (1,1,WCout)
    psq_ref[...] = jnp.sum(acc * acc, axis=0, keepdims=True)[None]


def _conv_bn_relu_kernel(slab_ref, w2_ref, scale_ref, shift_ref, out_ref, *,
                         KH, T):
    """Recompute the conv tile, apply per-channel affine + ReLU, lane-dense store."""
    acc = _conv_rows(slab_ref[...], w2_ref[...], KH, T)
    y = acc * scale_ref[...] + shift_ref[...]
    out_ref[...] = jnp.maximum(y, 0.0)[None, :, :]


def conv2d_transpose_bn_relu(x, w_t, b, gamma, beta, *, stride, padding,
                             output_padding=0, eps=1e-5,
                             compute_dtype=jnp.float32):
    """x: (N, Cin, H, W) f32 NCHW.  w_t: (Cin, Cout, KH, KW) ConvTranspose2d weight.

    Returns relu(batchnorm(conv_transpose(x))) in NCHW with BatchNorm using
    training-mode batch statistics (biased variance), matching the PyTorch
    module's forward.  Set compute_dtype=jnp.bfloat16 to halve input DMA on
    real workloads (f32 kept here for a tight correctness check).
    """
    del b  # ConvTranspose bias cancels exactly under train-mode BatchNorm.
    N, Cin, H, W = x.shape
    cin_w, Cout, KH, KW = w_t.shape
    assert cin_w == Cin
    s = stride
    H_out = (H - 1) * s - 2 * padding + KH + output_padding
    W_out = (W - 1) * s - 2 * padding + KW + output_padding

    # --- XLA glue: transposed conv == stride-1 conv over zero-inserted input ---
    x_nhwc = jnp.transpose(x, (0, 2, 3, 1)).astype(jnp.float32)
    H_up, W_up = (H - 1) * s + 1, (W - 1) * s + 1
    x_up = jnp.zeros((N, H_up, W_up, Cin), jnp.float32).at[:, ::s, ::s, :].set(x_nhwc)
    ph, pw = KH - 1 - padding, KW - 1 - padding
    # TODO(synk): padding > kernel_size - 1 would require cropping, not padding.
    assert ph >= 0 and pw >= 0
    x_pad = jnp.pad(x_up, ((0, 0),
                           (ph, ph + output_padding),
                           (pw, pw + output_padding),
                           (0, 0)))
    Hp, Wp = x_pad.shape[1], x_pad.shape[2]
    assert Hp == H_out + KH - 1 and Wp == W_out + KW - 1
    WC_in = Wp * Cin           # merged lane dim of input rows
    WC_out = W_out * Cout      # merged lane dim of output rows

    # Row-tile size: as large as a ~2 MiB f32 output block allows (amortizes
    # per-step overhead, stays far below v5e/v6e/v7x VMEM even double-buffered),
    # preferring a divisor of H_out so no stats masking is needed.
    max_out_elems = (2 * 1024 * 1024) // 4
    T = H_out
    if H_out * WC_out > max_out_elems:
        divs = [d for d in range(1, H_out + 1)
                if H_out % d == 0 and d * WC_out <= max_out_elems]
        T = max(divs) if divs else max(1, max_out_elems // WC_out)
    G_h = -(-H_out // T)
    H_pad = G_h * T
    T_in = T + KH - 1
    G = N * G_h

    # Halo'd row slabs (G, T_in, Wp*Cin): only the (KH-1)-row halo is
    # duplicated; no im2col matrix is ever built in HBM.
    x_m = x_pad.reshape(N, Hp, WC_in)
    x_m = jnp.pad(x_m, ((0, 0), (0, H_pad + KH - 1 - Hp), (0, 0)))
    row_idx = jnp.arange(G_h)[:, None] * T + jnp.arange(T_in)[None, :]
    slabs = x_m[:, row_idx, :].reshape(G, T_in, WC_in).astype(compute_dtype)

    # ConvTranspose weight -> flipped conv weight -> banded (Toeplitz) matrices:
    #   W2[kh, (w+kw)*Cin + ci, w*Cout + co] = w_conv[kh, kw, ci, co]
    # TODO(synk): for large W*Cin*Cout, tile W (or fall back to per-tap matmuls)
    # to bound W2's size.
    w_conv = jnp.transpose(w_t[:, :, ::-1, ::-1], (2, 3, 0, 1)).astype(jnp.float32)
    kw_i, ci_i, w_i, co_i = jnp.meshgrid(jnp.arange(KW), jnp.arange(Cin),
                                         jnp.arange(W_out), jnp.arange(Cout),
                                         indexing="ij")
    rows = (w_i + kw_i) * Cin + ci_i
    cols = w_i * Cout + co_i
    w2 = jnp.zeros((KH, WC_in, WC_out), jnp.float32)
    w2 = w2.at[:, rows, cols].set(w_conv[:, kw_i, ci_i, co_i]).astype(compute_dtype)

    grid = (G,)
    cparams = pltpu.CompilerParams(
        dimension_semantics=("parallel",),        # megacore-shardable on v7x
        vmem_limit_bytes=32 * 1024 * 1024,        # explicit; actual use ~1-2 MiB
    )
    flops = 2 * G * KH * T * WC_in * WC_out
    slab_bytes = G * T_in * WC_in * slabs.dtype.itemsize
    w2_bytes = KH * WC_in * WC_out * w2.dtype.itemsize

    slab_spec = pl.BlockSpec((1, T_in, WC_in), lambda g: (g, 0, 0))
    w2_spec = pl.BlockSpec((KH, WC_in, WC_out), lambda g: (0, 0, 0))   # VMEM-resident

    # ---- pass 1: per-tile partial BN batch statistics (lane-dense outputs) ----
    psum, psq = pl.pallas_call(
        functools.partial(_stats_kernel, KH=KH, T=T, G_h=G_h,
                          H_out=H_out, H_pad=H_pad),
        out_shape=(jax.ShapeDtypeStruct((G, 1, WC_out), jnp.float32),
                   jax.ShapeDtypeStruct((G, 1, WC_out), jnp.float32)),
        grid_spec=pltpu.PrefetchScalarGridSpec(
            num_scalar_prefetch=0, grid=grid,
            in_specs=[slab_spec, w2_spec],
            out_specs=[pl.BlockSpec((1, 1, WC_out), lambda g: (g, 0, 0)),
                       pl.BlockSpec((1, 1, WC_out), lambda g: (g, 0, 0))]),
        compiler_params=cparams,
        cost_estimate=pl.CostEstimate(
            flops=flops, transcendentals=0,
            bytes_accessed=slab_bytes + w2_bytes + 2 * G * WC_out * 4),
    )(slabs, w2)

    # ---- XLA glue: finalize BN batch stats -> per-channel scale / shift -------
    count = jnp.float32(N * H_out * W_out)
    sum_c = jnp.sum(psum[:, 0, :], axis=0).reshape(W_out, Cout).sum(axis=0)
    sq_c = jnp.sum(psq[:, 0, :], axis=0).reshape(W_out, Cout).sum(axis=0)
    mean = sum_c / count
    var = jnp.maximum(sq_c / count - mean * mean, 0.0)
    inv_std = jax.lax.rsqrt(var + eps)
    scale = gamma.astype(jnp.float32) * inv_std
    shift = beta.astype(jnp.float32) - mean * scale
    scale_m = jnp.tile(scale, W_out).reshape(1, WC_out)   # index j -> scale[j % Cout]
    shift_m = jnp.tile(shift, W_out).reshape(1, WC_out)

    # ---- pass 2: conv (recomputed) + affine + ReLU, lane-dense stores ---------
    out_m = pl.pallas_call(
        functools.partial(_conv_bn_relu_kernel, KH=KH, T=T),
        out_shape=jax.ShapeDtypeStruct((G, T, WC_out), jnp.float32),
        grid_spec=pltpu.PrefetchScalarGridSpec(
            num_scalar_prefetch=0, grid=grid,
            in_specs=[slab_spec, w2_spec,
                      pl.BlockSpec((1, WC_out), lambda g: (0, 0)),
                      pl.BlockSpec((1, WC_out), lambda g: (0, 0))],
            out_specs=pl.BlockSpec((1, T, WC_out), lambda g: (g, 0, 0))),
        compiler_params=cparams,
        cost_estimate=pl.CostEstimate(
            flops=flops, transcendentals=0,
            bytes_accessed=slab_bytes + w2_bytes + G * T * WC_out * 4),
    )(slabs, w2, scale_m, shift_m)

    out = out_m.reshape(N, H_pad, W_out, Cout)[:, :H_out]
    return jnp.transpose(out, (0, 3, 1, 2))   # NHWC -> NCHW


def _reference(x, w_t, b, gamma, beta, stride, padding, output_padding, eps=1e-5):
    """Pure-JAX reference matching PyTorch ConvTranspose2d + BatchNorm2d(train) + ReLU."""
    _, Cin, _, _ = x.shape
    _, Cout, KH, KW = w_t.shape
    w_conv = jnp.transpose(w_t[:, :, ::-1, ::-1], (1, 0, 2, 3))  # (Cout, Cin, KH, KW)
    y = jax.lax.conv_general_dilated(
        x, w_conv,
        window_strides=(1, 1),
        padding=((KH - 1 - padding, KH - 1 - padding + output_padding),
                 (KW - 1 - padding, KW - 1 - padding + output_padding)),
        lhs_dilation=(stride, stride),
        dimension_numbers=("NCHW", "OIHW", "NCHW"))
    y = y + b.reshape(1, Cout, 1, 1)
    mean = jnp.mean(y, axis=(0, 2, 3), keepdims=True)
    var = jnp.mean((y - mean) ** 2, axis=(0, 2, 3), keepdims=True)
    yn = (y - mean) * jax.lax.rsqrt(var + eps)
    yn = yn * gamma.reshape(1, Cout, 1, 1) + beta.reshape(1, Cout, 1, 1)
    return jnp.maximum(yn, 0.0)


if __name__ == "__main__":
    # Module config: Conv2dTranspose(cin=4, cout=8, kernel_size=4, stride=2, padding=1)
    cin, cout, ksize, stride, padding, out_pad = 4, 8, 4, 2, 1, 0
    N, H, W = 2, 16, 16

    key = jax.random.PRNGKey(0)
    k1, k2, k3, k4, k5 = jax.random.split(key, 5)
    x = jax.random.normal(k1, (N, cin, H, W), jnp.float32)

    # Deterministic synthetic parameters (PyTorch-style uniform bounds).
    wbound = 1.0 / math.sqrt(cin * ksize * ksize)
    w_t = jax.random.uniform(k2, (cin, cout, ksize, ksize), jnp.float32,
                             -wbound, wbound)                 # ConvTranspose2d.weight
    b = jax.random.uniform(k3, (cout,), jnp.float32, -wbound, wbound)
    gamma = jax.random.uniform(k4, (cout,), jnp.float32, 0.5, 1.5)
    beta = jax.random.uniform(k5, (cout,), jnp.float32, -0.5, 0.5)

    fn = jax.jit(functools.partial(conv2d_transpose_bn_relu,
                                   stride=stride, padding=padding,
                                   output_padding=out_pad))
    out = jax.block_until_ready(fn(x, w_t, b, gamma, beta))

    H_out = (H - 1) * stride - 2 * padding + ksize + out_pad
    W_out = (W - 1) * stride - 2 * padding + ksize + out_pad
    assert out.shape == (N, cout, H_out, W_out), out.shape

    ref = _reference(x, w_t, b, gamma, beta, stride, padding, out_pad)
    max_err = float(jnp.max(jnp.abs(out - ref)))
    assert max_err < 1e-3, f"max abs err {max_err}"

    print("KERNEL_OK")
</pallas_src>

<mosaic_0001>
module attributes {stable_mosaic.version = 11 : i64} {
  func.func @_stats_kernel(%arg0: i32, %arg1: memref<1x35x140xf32, #tpu.memory_space<vmem>>, %arg2: memref<4x140x256xf32, #tpu.memory_space<vmem>>, %arg3: memref<1x1x256xf32, #tpu.memory_space<vmem>>, %arg4: memref<1x1x256xf32, #tpu.memory_space<vmem>>) attributes {dimension_semantics = [#tpu.dimension_semantics<parallel>], iteration_bounds = array<i64: 2>, scalar_prefetch = 0 : i64, scratch_operands = 0 : i64, tpu.core_type = #tpu.core_type<tc>, window_params = [{transform_indices = @transform_0, window_bounds = array<i64: 1, 35, 140>}, {pipeline_mode = #tpu.pipeline_mode<synchronous>, transform_indices = @transform_1, window_bounds = array<i64: 4, 140, 256>}, {transform_indices = @transform_2, window_bounds = array<i64: 1, 1, 256>}, {transform_indices = @transform_3, window_bounds = array<i64: 1, 1, 256>}]} {
    %c0 = arith.constant 0 : index
    %c0_0 = arith.constant 0 : index
    %c0_1 = arith.constant 0 : index
    %0 = vector.load %arg1[%c0, %c0_0, %c0_1] : memref<1x35x140xf32, #tpu.memory_space<vmem>>, vector<1x35x140xf32>
    %c0_2 = arith.constant 0 : index
    %c0_3 = arith.constant 0 : index
    %c0_4 = arith.constant 0 : index
    %1 = vector.load %arg2[%c0_2, %c0_3, %c0_4] : memref<4x140x256xf32, #tpu.memory_space<vmem>>, vector<4x140x256xf32>
    %2 = vector.extract_strided_slice %0 {offsets = [0, 0, 0], sizes = [1, 32, 140], strides = [1, 1, 1]} : vector<1x35x140xf32> to vector<1x32x140xf32>
    %3 = vector.shape_cast %2 : vector<1x32x140xf32> to vector<32x140xf32>
    %4 = vector.extract_strided_slice %1 {offsets = [0, 0, 0], sizes = [1, 140, 256], strides = [1, 1, 1]} : vector<4x140x256xf32> to vector<1x140x256xf32>
    %5 = vector.shape_cast %4 : vector<1x140x256xf32> to vector<140x256xf32>
    %cst = arith.constant dense<0.000000e+00> : vector<32x256xf32>
    %6 = tpu.matmul %3, %5, %cst {dimension_numbers = #tpu.dot_dimension_numbers<[1], [0], [0], [1], [0, 0, 1, 1], [], []>} : vector<32x140xf32>, vector<140x256xf32>, vector<32x256xf32> -> vector<32x256xf32>
    %7 = vector.extract_strided_slice %0 {offsets = [0, 1, 0], sizes = [1, 32, 140], strides = [1, 1, 1]} : vector<1x35x140xf32> to vector<1x32x140xf32>
    %8 = vector.shape_cast %7 : vector<1x32x140xf32> to vector<32x140xf32>
    %9 = vector.extract_strided_slice %1 {offsets = [1, 0, 0], sizes = [1, 140, 256], strides = [1, 1, 1]} : vector<4x140x256xf32> to vector<1x140x256xf32>
    %10 = vector.shape_cast %9 : vector<1x140x256xf32> to vector<140x256xf32>
    %cst_5 = arith.constant dense<0.000000e+00> : vector<32x256xf32>
    %11 = tpu.matmul %8, %10, %cst_5 {dimension_numbers = #tpu.dot_dimension_numbers<[1], [0], [0], [1], [0, 0, 1, 1], [], []>} : vector<32x140xf32>, vector<140x256xf32>, vector<32x256xf32> -> vector<32x256xf32>
    %12 = arith.addf %6, %11 : vector<32x256xf32>
    %13 = vector.extract_strided_slice %0 {offsets = [0, 2, 0], sizes = [1, 32, 140], strides = [1, 1, 1]} : vector<1x35x140xf32> to vector<1x32x140xf32>
    %14 = vector.shape_cast %13 : vector<1x32x140xf32> to vector<32x140xf32>
    %15 = vector.extract_strided_slice %1 {offsets = [2, 0, 0], sizes = [1, 140, 256], strides = [1, 1, 1]} : vector<4x140x256xf32> to vector<1x140x256xf32>
    %16 = vector.shape_cast %15 : vector<1x140x256xf32> to vector<140x256xf32>
    %cst_6 = arith.constant dense<0.000000e+00> : vector<32x256xf32>
    %17 = tpu.matmul %14, %16, %cst_6 {dimension_numbers = #tpu.dot_dimension_numbers<[1], [0], [0], [1], [0, 0, 1, 1], [], []>} : vector<32x140xf32>, vector<140x256xf32>, vector<32x256xf32> -> vector<32x256xf32>
    %18 = arith.addf %12, %17 : vector<32x256xf32>
    %19 = vector.extract_strided_slice %0 {offsets = [0, 3, 0], sizes = [1, 32, 140], strides = [1, 1, 1]} : vector<1x35x140xf32> to vector<1x32x140xf32>
    %20 = vector.shape_cast %19 : vector<1x32x140xf32> to vector<32x140xf32>
    %21 = vector.extract_strided_slice %1 {offsets = [3, 0, 0], sizes = [1, 140, 256], strides = [1, 1, 1]} : vector<4x140x256xf32> to vector<1x140x256xf32>
    %22 = vector.shape_cast %21 : vector<1x140x256xf32> to vector<140x256xf32>
    %cst_7 = arith.constant dense<0.000000e+00> : vector<32x256xf32>
    %23 = tpu.matmul %20, %22, %cst_7 {dimension_numbers = #tpu.dot_dimension_numbers<[1], [0], [0], [1], [0, 0, 1, 1], [], []>} : vector<32x140xf32>, vector<140x256xf32>, vector<32x256xf32> -> vector<32x256xf32>
    %24 = arith.addf %18, %23 : vector<32x256xf32>
    %cst_8 = arith.constant dense<0.000000e+00> : vector<256xf32>
    %25 = vector.multi_reduction <add>, %24, %cst_8 [0] : vector<32x256xf32> to vector<256xf32>
    %26 = vector.shape_cast %25 : vector<256xf32> to vector<1x256xf32>
    %27 = vector.shape_cast %26 : vector<1x256xf32> to vector<1x1x256xf32>
    %c0_9 = arith.constant 0 : index
    %c0_10 = arith.constant 0 : index
    %c0_11 = arith.constant 0 : index
    %28 = vector.load %arg3[%c0_9, %c0_10, %c0_11] : memref<1x1x256xf32, #tpu.memory_space<vmem>>, vector<1x1x256xf32>
    tpu.vector_store %arg3[%c0_9, %c0_10, %c0_11], %27 {strides = array<i32>} : memref<1x1x256xf32, #tpu.memory_space<vmem>>, vector<1x1x256xf32>,
    %29 = arith.mulf %24, %24 : vector<32x256xf32>
    %cst_12 = arith.constant dense<0.000000e+00> : vector<256xf32>
    %30 = vector.multi_reduction <add>, %29, %cst_12 [0] : vector<32x256xf32> to vector<256xf32>
    %31 = vector.shape_cast %30 : vector<256xf32> to vector<1x256xf32>
    %32 = vector.shape_cast %31 : vector<1x256xf32> to vector<1x1x256xf32>
    %c0_13 = arith.constant 0 : index
    %c0_14 = arith.constant 0 : index
    %c0_15 = arith.constant 0 : index
    %33 = vector.load %arg4[%c0_13, %c0_14, %c0_15] : memref<1x1x256xf32, #tpu.memory_space<vmem>>, vector<1x1x256xf32>
    tpu.vector_store %arg4[%c0_13, %c0_14, %c0_15], %32 {strides = array<i32>} : memref<1x1x256xf32, #tpu.memory_space<vmem>>, vector<1x1x256xf32>,
    return
  }
  func.func @transform_0(%arg0: i32) -> (i32, i32, i32) {
    %c0_i32 = arith.constant 0 : i32
    %c0_i32_0 = arith.constant 0 : i32
    %c0_i32_1 = arith.constant 0 : i32
    return %arg0, %c0_i32, %c0_i32_0 : i32, i32, i32
  }
  func.func @transform_1(%arg0: i32) -> (i32, i32, i32) {
    %c0_i32 = arith.constant 0 : i32
    %c0_i32_0 = arith.constant 0 : i32
    %c0_i32_1 = arith.constant 0 : i32
    %c0_i32_2 = arith.constant 0 : i32
    return %c0_i32, %c0_i32_0, %c0_i32_1 : i32, i32, i32
  }
  func.func @transform_2(%arg0: i32) -> (i32, i32, i32) {
    %c0_i32 = arith.constant 0 : i32
    %c0_i32_0 = arith.constant 0 : i32
    %c0_i32_1 = arith.constant 0 : i32
    return %arg0, %c0_i32, %c0_i32_0 : i32, i32, i32
  }
  func.func @transform_3(%arg0: i32) -> (i32, i32, i32) {
    %c0_i32 = arith.constant 0 : i32
    %c0_i32_0 = arith.constant 0 : i32
    %c0_i32_1 = arith.constant 0 : i32
    return %arg0, %c0_i32, %c0_i32_0 : i32, i32, i32
  }
}

module attributes {stable_mosaic.version = 11 : i64} {
  func.func @_conv_bn_relu_kernel(%arg0: i32, %arg1: memref<1x35x140xf32, #tpu.memory_space<vmem>>, %arg2: memref<4x140x256xf32, #tpu.memory_space<vmem>>, %arg3: memref<1x256xf32, #tpu.memory_space<vmem>>, %arg4: memref<1x256xf32, #tpu.memory_space<vmem>>, %arg5: memref<1x32x256xf32, #tpu.memory_space<vmem>>) attributes {dimension_semantics = [#tpu.dimension_semantics<parallel>], iteration_bounds = array<i64: 2>, scalar_prefetch = 0 : i64, scratch_operands = 0 : i64, tpu.core_type = #tpu.core_type<tc>, window_params = [{transform_indices = @transform_0, window_bounds = array<i64: 1, 35, 140>}, {pipeline_mode = #tpu.pipeline_mode<synchronous>, transform_indices = @transform_1, window_bounds = array<i64: 4, 140, 256>}, {pipeline_mode = #tpu.pipeline_mode<synchronous>, transform_indices = @transform_2, window_bounds = array<i64: 1, 256>}, {pipeline_mode = #tpu.pipeline_mode<synchronous>, transform_indices = @transform_3, window_bounds = array<i64: 1, 256>}, {transform_indices = @transform_4, window_bounds = array<i64: 1, 32, 256>}]} {
    %c0 = arith.constant 0 : index
    %c0_0 = arith.constant 0 : index
    %c0_1 = arith.constant 0 : index
    %0 = vector.load %arg1[%c0, %c0_0, %c0_1] : memref<1x35x140xf32, #tpu.memory_space<vmem>>, vector<1x35x140xf32>
    %c0_2 = arith.constant 0 : index
    %c0_3 = arith.constant 0 : index
    %c0_4 = arith.constant 0 : index
    %1 = vector.load %arg2[%c0_2, %c0_3, %c0_4] : memref<4x140x256xf32, #tpu.memory_space<vmem>>, vector<4x140x256xf32>
    %2 = vector.extract_strided_slice %0 {offsets = [0, 0, 0], sizes = [1, 32, 140], strides = [1, 1, 1]} : vector<1x35x140xf32> to vector<1x32x140xf32>
    %3 = vector.shape_cast %2 : vector<1x32x140xf32> to vector<32x140xf32>
    %4 = vector.extract_strided_slice %1 {offsets = [0, 0, 0], sizes = [1, 140, 256], strides = [1, 1, 1]} : vector<4x140x256xf32> to vector<1x140x256xf32>
    %5 = vector.shape_cast %4 : vector<1x140x256xf32> to vector<140x256xf32>
    %cst = arith.constant dense<0.000000e+00> : vector<32x256xf32>
    %6 = tpu.matmul %3, %5, %cst {dimension_numbers = #tpu.dot_dimension_numbers<[1], [0], [0], [1], [0, 0, 1, 1], [], []>} : vector<32x140xf32>, vector<140x256xf32>, vector<32x256xf32> -> vector<32x256xf32>
    %7 = vector.extract_strided_slice %0 {offsets = [0, 1, 0], sizes = [1, 32, 140], strides = [1, 1, 1]} : vector<1x35x140xf32> to vector<1x32x140xf32>
    %8 = vector.shape_cast %7 : vector<1x32x140xf32> to vector<32x140xf32>
    %9 = vector.extract_strided_slice %1 {offsets = [1, 0, 0], sizes = [1, 140, 256], strides = [1, 1, 1]} : vector<4x140x256xf32> to vector<1x140x256xf32>
    %10 = vector.shape_cast %9 : vector<1x140x256xf32> to vector<140x256xf32>
    %cst_5 = arith.constant dense<0.000000e+00> : vector<32x256xf32>
    %11 = tpu.matmul %8, %10, %cst_5 {dimension_numbers = #tpu.dot_dimension_numbers<[1], [0], [0], [1], [0, 0, 1, 1], [], []>} : vector<32x140xf32>, vector<140x256xf32>, vector<32x256xf32> -> vector<32x256xf32>
    %12 = arith.addf %6, %11 : vector<32x256xf32>
    %13 = vector.extract_strided_slice %0 {offsets = [0, 2, 0], sizes = [1, 32, 140], strides = [1, 1, 1]} : vector<1x35x140xf32> to vector<1x32x140xf32>
    %14 = vector.shape_cast %13 : vector<1x32x140xf32> to vector<32x140xf32>
    %15 = vector.extract_strided_slice %1 {offsets = [2, 0, 0], sizes = [1, 140, 256], strides = [1, 1, 1]} : vector<4x140x256xf32> to vector<1x140x256xf32>
    %16 = vector.shape_cast %15 : vector<1x140x256xf32> to vector<140x256xf32>
    %cst_6 = arith.constant dense<0.000000e+00> : vector<32x256xf32>
    %17 = tpu.matmul %14, %16, %cst_6 {dimension_numbers = #tpu.dot_dimension_numbers<[1], [0], [0], [1], [0, 0, 1, 1], [], []>} : vector<32x140xf32>, vector<140x256xf32>, vector<32x256xf32> -> vector<32x256xf32>
    %18 = arith.addf %12, %17 : vector<32x256xf32>
    %19 = vector.extract_strided_slice %0 {offsets = [0, 3, 0], sizes = [1, 32, 140], strides = [1, 1, 1]} : vector<1x35x140xf32> to vector<1x32x140xf32>
    %20 = vector.shape_cast %19 : vector<1x32x140xf32> to vector<32x140xf32>
    %21 = vector.extract_strided_slice %1 {offsets = [3, 0, 0], sizes = [1, 140, 256], strides = [1, 1, 1]} : vector<4x140x256xf32> to vector<1x140x256xf32>
    %22 = vector.shape_cast %21 : vector<1x140x256xf32> to vector<140x256xf32>
    %cst_7 = arith.constant dense<0.000000e+00> : vector<32x256xf32>
    %23 = tpu.matmul %20, %22, %cst_7 {dimension_numbers = #tpu.dot_dimension_numbers<[1], [0], [0], [1], [0, 0, 1, 1], [], []>} : vector<32x140xf32>, vector<140x256xf32>, vector<32x256xf32> -> vector<32x256xf32>
    %24 = arith.addf %18, %23 : vector<32x256xf32>
    %c0_8 = arith.constant 0 : index
    %c0_9 = arith.constant 0 : index
    %25 = vector.load %arg3[%c0_8, %c0_9] : memref<1x256xf32, #tpu.memory_space<vmem>>, vector<1x256xf32>
    %26 = vector.broadcast %25 : vector<1x256xf32> to vector<32x256xf32>
    %27 = arith.mulf %24, %26 : vector<32x256xf32>
    %c0_10 = arith.constant 0 : index
    %c0_11 = arith.constant 0 : index
    %28 = vector.load %arg4[%c0_10, %c0_11] : memref<1x256xf32, #tpu.memory_space<vmem>>, vector<1x256xf32>
    %29 = vector.broadcast %28 : vector<1x256xf32> to vector<32x256xf32>
    %30 = arith.addf %27, %29 : vector<32x256xf32>
    %cst_12 = arith.constant 0.000000e+00 : f32
    %31 = vector.broadcast %cst_12 : f32 to vector<32x256xf32>
    %32 = arith.maximumf %30, %31 : vector<32x256xf32>
    %33 = vector.shape_cast %32 : vector<32x256xf32> to vector<1x32x256xf32>
    %c0_13 = arith.constant 0 : index
    %c0_14 = arith.constant 0 : index
    %c0_15 = arith.constant 0 : index
    %34 = vector.load %arg5[%c0_13, %c0_14, %c0_15] : memref<1x32x256xf32, #tpu.memory_space<vmem>>, vector<1x32x256xf32>
    tpu.vector_store %arg5[%c0_13, %c0_14, %c0_15], %33 {strides = array<i32>} : memref<1x32x256xf32, #tpu.memory_space<vmem>>, vector<1x32x256xf32>,
    return
  }
  func.func @transform_0(%arg0: i32) -> (i32, i32, i32) {
    %c0_i32 = arith.constant 0 : i32
    %c0_i32_0 = arith.constant 0 : i32
    %c0_i32_1 = arith.constant 0 : i32
    return %arg0, %c0_i32, %c0_i32_0 : i32, i32, i32
  }
  func.func @transform_1(%arg0: i32) -> (i32, i32, i32) {
    %c0_i32 = arith.constant 0 : i32
    %c0_i32_0 = arith.constant 0 : i32
    %c0_i32_1 = arith.constant 0 : i32
    %c0_i32_2 = arith.constant 0 : i32
    return %c0_i32, %c0_i32_0, %c0_i32_1 : i32, i32, i32
  }
  func.func @transform_2(%arg0: i32) -> (i32, i32) {
    %c0_i32 = arith.constant 0 : i32
    %c0_i32_0 = arith.constant 0 : i32
    %c0_i32_1 = arith.constant 0 : i32
    return %c0_i32, %c0_i32_0 : i32, i32
  }
  func.func @transform_3(%arg0: i32) -> (i32, i32) {
    %c0_i32 = arith.constant 0 : i32
    %c0_i32_0 = arith.constant 0 : i32
    %c0_i32_1 = arith.constant 0 : i32
    return %c0_i32, %c0_i32_0 : i32, i32
  }
  func.func @transform_4(%arg0: i32) -> (i32, i32, i32) {
    %c0_i32 = arith.constant 0 : i32
    %c0_i32_0 = arith.constant 0 : i32
    %c0_i32_1 = arith.constant 0 : i32
    return %arg0, %c0_i32, %c0_i32_0 : i32, i32, i32
  }
}

</mosaic_0001>

<llo_original>
// kernel: tile.13
$region0: #{tile.13}
  #allocation0 [shape = 's32[1]{0}', space=sflag, size = 0x4, scoped, tag = 'scoped memory for tile.13']
  %s0 = inlined_call_operand.vmem [shape: f32[8], index: 0, kind: input, shape index: {}]
  %s1 = inlined_call_operand.vmem [shape: f32[32,8], index: 1, kind: output, shape index: {}]
  // Predicated region
  $region2: #{tile.13} parent=0 // pred_check
    _
  $region3: #{tile.13} parent=0 // pred_check_branch
    %3 = sbr.rel (0) target = $region5
  $region4: #{tile.13} parent=0 // pred_region
    _
  $region5: #{tile.13} parent=0 // pred_fallthru
    _
  %v4 = vld [vmem:[%s0] ss:$0 sm:$0xff]
  %5 = vst [vmem:[%s1] sm:$0xff] %v4
  %s6 = scalar_lea.vmem %s1, 8
  %7 = vst [vmem:[%s6] sm:$0xff] %v4
  %s8 = scalar_lea.vmem %s1, 16
  %9 = vst [vmem:[%s8] sm:$0xff] %v4
  %s10 = scalar_lea.vmem %s1, 24
  %11 = vst [vmem:[%s10] sm:$0xff] %v4

// kernel: tile.14
$region0: #{tile.14}
  %s0 = inlined_call_operand.vmem [shape: f32[32,8], index: 0, kind: input, shape index: {}]
  %s1 = inlined_call_operand.vmem [shape: f32[1,256], index: 1, kind: output, shape index: {}]
  $region1: #{tile.14} parent=0
    #allocation0 [shape = 'u8[8192]{0}', space=vmem, size = 0x2000, scoped, tag = 'scoped mem for output reshape']
    %s2 = smov 3
    %v3 = vld [vmem:[%s0] ss:$16 sm:%s2]
    %vm4 = vcmask 64512
    %5 = vst.msk [vmem:[#allocation0] ss:$8 sm:$0x3] %vm4, %v3
    %s6 = scalar_lea.vmem %s0, 15
    %s7 = smov 3
    %v8 = vld [vmem:[%s6] ss:$16 sm:%s7]
    %9 = vrot.lane.b32.xlu0 %v8, 120
    %v10 = vpop.permute.xlu0 %9
    %vm11 = vcmask 1048512
    %12 = vst.msk [vmem:[#allocation0] ss:$8 sm:$0x3] %vm11, %v10
    %s13 = scalar_lea.vmem %s0, 14
    %s14 = smov 3
    %v15 = vld [vmem:[%s13] ss:$16 sm:%s14]
    %16 = vrot.lane.b32.xlu0 %v15, 112
    %v17 = vpop.permute.xlu0 %16
    %vm18 = vcmask 982912
    %19 = vst.msk [vmem:[#allocation0] ss:$8 sm:$0x3] %vm18, %v17
    %s20 = scalar_lea.vmem %s0, 13
    %s21 = smov 3
    %v22 = vld [vmem:[%s20] ss:$16 sm:%s21]
    %23 = vrot.lane.b32.xlu0 %v22, 104
    %v24 = vpop.permute.xlu0 %23
    %vm25 = vcmask 917312
    %26 = vst.msk [vmem:[#allocation0] ss:$8 sm:$0x3] %vm25, %v24
    %s27 = scalar_lea.vmem %s0, 12
    %s28 = smov 3
    %v29 = vld [vmem:[%s27] ss:$16 sm:%s28]
    %30 = vrot.lane.b32.xlu0 %v29, 96
    %v31 = vpop.permute.xlu0 %30
    %vm32 = vcmask 851712
    %33 = vst.msk [vmem:[#allocation0] ss:$8 sm:$0x3] %vm32, %v31
    %s34 = scalar_lea.vmem %s0, 11
    %s35 = smov 3
    %v36 = vld [vmem:[%s34] ss:$16 sm:%s35]
    %37 = vrot.lane.b32.xlu0 %v36, 88
    %v38 = vpop.permute.xlu0 %37
    %vm39 = vcmask 786112
    %40 = vst.msk [vmem:[#allocation0] ss:$8 sm:$0x3] %vm39, %v38
    %s41 = scalar_lea.vmem %s0, 10
    %s42 = smov 3
    %v43 = vld [vmem:[%s41] ss:$16 sm:%s42]
    %44 = vrot.lane.b32.xlu0 %v43, 80
    %v45 = vpop.permute.xlu0 %44
    %vm46 = vcmask 720512
    %47 = vst.msk [vmem:[#allocation0] ss:$8 sm:$0x3] %vm46, %v45
    %s48 = scalar_lea.vmem %s0, 9
    %s49 = smov 3
    %v50 = vld [vmem:[%s48] ss:$16 sm:%s49]
    %51 = vrot.lane.b32.xlu0 %v50, 72
    %v52 = vpop.permute.xlu0 %51
    %vm53 = vcmask 654912
    %54 = vst.msk [vmem:[#allocation0] ss:$8 sm:$0x3] %vm53, %v52
    %s55 = scalar_lea.vmem %s0, 8
    %s56 = smov 3
    %v57 = vld [vmem:[%s55] ss:$16 sm:%s56]
    %58 = vrot.lane.b32.xlu0 %v57, 64
    %v59 = vpop.permute.xlu0 %58
    %vm60 = vcmask 589312
    %61 = vst.msk [vmem:[#allocation0] ss:$8 sm:$0x3] %vm60, %v59
    %s62 = scalar_lea.vmem %s0, 7
    %s63 = smov 3
    %v64 = vld [vmem:[%s62] ss:$16 sm:%s63]
    %65 = vrot.lane.b32.xlu0 %v64, 56
    %v66 = vpop.permute.xlu0 %65
    %vm67 = vcmask 523712
    %68 = vst.msk [vmem:[#allocation0] ss:$8 sm:$0x3] %vm67, %v66
    %s69 = scalar_lea.vmem %s0, 6
    %s70 = smov 3
    %v71 = vld [vmem:[%s69] ss:$16 sm:%s70]
    %72 = vrot.lane.b32.xlu0 %v71, 48
    %v73 = vpop.permute.xlu0 %72
    %vm74 = vcmask 458112
    %75 = vst.msk [vmem:[#allocation0] ss:$8 sm:$0x3] %vm74, %v73
    %s76 = scalar_lea.vmem %s0, 5
    %s77 = smov 3
    %v78 = vld [vmem:[%s76] ss:$16 sm:%s77]
    %79 = vrot.lane.b32.xlu0 %v78, 40
    %v80 = vpop.permute.xlu0 %79
    %vm81 = vcmask 392512
    %82 = vst.msk [vmem:[#allocation0] ss:$8 sm:$0x3] %vm81, %v80
    %s83 = scalar_lea.vmem %s0, 4
    %s84 = smov 3
    %v85 = vld [vmem:[%s83] ss:$16 sm:%s84]
    %86 = vrot.lane.b32.xlu0 %v85, 32
    %v87 = vpop.permute.xlu0 %86
    %vm88 = vcmask 326912
    %89 = vst.msk [vmem:[#allocation0] ss:$8 sm:$0x3] %vm88, %v87
    %s90 = scalar_lea.vmem %s0, 3
    %s91 = smov 3
    %v92 = vld [vmem:[%s90] ss:$16 sm:%s91]
    %93 = vrot.lane.b32.xlu0 %v92, 24
    %v94 = vpop.permute.xlu0 %93
    %vm95 = vcmask 261312
    %96 = vst.msk [vmem:[#allocation0] ss:$8 sm:$0x3] %vm95, %v94
    %s97 = scalar_lea.vmem %s0, 2
    %s98 = smov 3
    %v99 = vld [vmem:[%s97] ss:$16 sm:%s98]
    %100 = vrot.lane.b32.xlu0 %v99, 16
    %v101 = vpop.permute.xlu0 %100
    %vm102 = vcmask 195712
    %103 = vst.msk [vmem:[#allocation0] ss:$8 sm:$0x3] %vm102, %v101
    %s104 = scalar_lea.vmem %s0, 1
    %s105 = smov 3
    %v106 = vld [vmem:[%s104] ss:$16 sm:%s105]
    %107 = vrot.lane.b32.xlu0 %v106, 8
    %v108 = vpop.permute.xlu0 %107
    %vm109 = vcmask 130112
    %110 = vst.msk [vmem:[#allocation0] ss:$8 sm:$0x3] %vm109, %v108
    %s112 = sshllo.u32 0, 1
    %v114 = vld [vmem:[#allocation0] sm:%s112]
    %s115 = sshllo.u32 0, 1
    %116 = vst [vmem:[%s1] sm:%s115] %v114
    %s117 = scalar_lea.vmem [#allocation0], 8
    %v118 = vld [vmem:[%s117] sm:%s112]
    %s119 = sshllo.u32 0, 1
    %s120 = scalar_lea.vmem %s1, 1
    %121 = vst [vmem:[%s120] sm:%s119] %v118

// kernel: conv2d_transpose_bn_relu.2
$region0: #{conv2d_transpose_bn_relu.2}
  #allocation0 [shape = 'u32[]', space=smem, size = 0x4, offset = 0x4, fixed_abs, tag = 'smem constant byte address 0x4 - core index']
  #allocation1 [shape = 'u32[144,128]{1,0:T(1,128)}', space=vmem, size = 0x12000, scoped, tag = 'internal scratch']
  %s0 = inlined_call_operand.vmem [shape: f32[2,35,140], index: 0, kind: input, shape index: {}]
  %s1 = inlined_call_operand.vmem [shape: f32[4,140,256], index: 1, kind: input, shape index: {}]
  %s2 = inlined_call_operand.vmem [shape: f32[2,1,256], index: 2, kind: output, shape index: {0}]
  %s3 = inlined_call_operand.vmem [shape: f32[2,1,256], index: 3, kind: output, shape index: {1}]
  %4 = xla_tuple %s2, %s3
  %s5 = sld [smem:[#allocation0]]
  $region49: #{conv2d_transpose_bn_relu.2} parent=0
    _
  %s7 = ssub.s32 1, %s5
  %s8 = scalar_select 0, %s7, %s5
  loop: start=0, step=1, limit=4
  $region2: #{conv2d_transpose_bn_relu.2} parent=0 // loop_pre_header
    _
  $region3: #{conv2d_transpose_bn_relu.2} parent=0 // loop_header
    %s10 = sphi 0, %s14
    %p11 = scmp.ge.s32.totalorder %s10, 4
    %s20 = sphi 0, %s22
    %s23 = sphi 0, %s20
    %s24 = sphi 0, %s23
    %s40 = sphi 0, %s24
    %s44 = sphi 0, %s44
    %s46 = sphi 0, %s44
    %s47 = sphi 0, %s46
    %s61 = sphi 0, %s47
    %s67 = sphi 0, %s69
    %s70 = sphi 0, %s67
    %s71 = sphi 0, %s70
    %s87 = sphi 0, %s71
    %s93 = sphi 0, %s95
    %s96 = sphi 0, %s93
    %s97 = sphi 0, %s96
    %s113 = sphi 0, %s97
  $region4: #{conv2d_transpose_bn_relu.2} parent=0 // loop_header_branch
    %13 = sbr.rel (%p11) target = $region8
  $region5: #{conv2d_transpose_bn_relu.2} parent=0 // loop_body
    %s15 = ssub.s32 %s10, 1
    %s16 = ssub.s32 %s10, 2
    %s17 = sadd.s32 %s10, 1
    %s18 = ssub.s32 %s10, %s17
    %p19 = scmp.eq.s32.totalorder %s18, 0
    %s21 = sadd.s32 %s20, 1
    %s22 = scalar_select %p19, %s20, %s21
    %p25 = pneg %p19
    %p26 = scmp.eq.s32.totalorder %s10, 1
    %p27 = por %p25, %p26
    %p28 = scmp.ne.s32.totalorder %s20, %s23
    %p29 = scmp.eq.s32.totalorder %s10, 0
    %p30 = por %p28, %p29
    %p31 = scmp.ne.s32.totalorder %s20, %s23
    %p32 = scmp.eq.s32.totalorder %s15, 1
    %p33 = por %p31, %p32
    %p34 = scmp.ne.s32.totalorder %s23, %s24
    %p35 = scmp.eq.s32.totalorder %s15, 0
    %p36 = por %p34, %p35
    %p37 = scmp.ne.s32.totalorder %s23, %s24
    %p38 = scmp.eq.s32.totalorder %s16, 1
    %p39 = por %p37, %p38
    %p41 = scmp.ne.s32.totalorder %s24, %s40
    %p42 = scmp.eq.s32.totalorder %s16, 0
    %p43 = por %p41, %p42
    %s45 = sadd.s32 %s44, 1
    %p48 = scmp.eq.s32.totalorder %s10, 1
    %p49 = scmp.ne.s32.totalorder %s44, %s46
    %p50 = scmp.eq.s32.totalorder %s10, 0
    %p51 = por %p49, %p50
    %p52 = scmp.ne.s32.totalorder %s44, %s46
    %p53 = scmp.eq.s32.totalorder %s15, 1
    %p54 = por %p52, %p53
    %p55 = scmp.ne.s32.totalorder %s46, %s47
    %p56 = scmp.eq.s32.totalorder %s15, 0
    %p57 = por %p55, %p56
    %p58 = scmp.ne.s32.totalorder %s46, %s47
    %p59 = scmp.eq.s32.totalorder %s16, 1
    %p60 = por %p58, %p59
    %p62 = scmp.ne.s32.totalorder %s47, %s61
    %p63 = scmp.eq.s32.totalorder %s16, 0
    %p64 = por %p62, %p63
    %s65 = ssub.s32 %s10, %s17
    %p66 = scmp.eq.s32.totalorder %s65, 0
    %s68 = sadd.s32 %s67, 1
    %s69 = scalar_select %p66, %s67, %s68
    %p72 = pneg %p66
    %p73 = scmp.eq.s32.totalorder %s10, 1
    %p74 = por %p72, %p73
    %p75 = scmp.ne.s32.totalorder %s67, %s70
    %p76 = scmp.eq.s32.totalorder %s10, 0
    %p77 = por %p75, %p76
    %p78 = scmp.ne.s32.totalorder %s67, %s70
    %p79 = scmp.eq.s32.totalorder %s15, 1
    %p80 = por %p78, %p79
    %p81 = scmp.ne.s32.totalorder %s70, %s71
    %p82 = scmp.eq.s32.totalorder %s15, 0
    %p83 = por %p81, %p82
    %p84 = scmp.ne.s32.totalorder %s70, %s71
    %p85 = scmp.eq.s32.totalorder %s16, 1
    %p86 = por %p84, %p85
    %p88 = scmp.ne.s32.totalorder %s71, %s87
    %p89 = scmp.eq.s32.totalorder %s16, 0
    %p90 = por %p88, %p89
    %s91 = ssub.s32 %s10, %s17
    %p92 = scmp.eq.s32.totalorder %s91, 0
    %s94 = sadd.s32 %s93, 1
    %s95 = scalar_select %p92, %s93, %s94
    %p98 = pneg %p92
    %p99 = scmp.eq.s32.totalorder %s10, 1
    %p100 = por %p98, %p99
    %p101 = scmp.ne.s32.totalorder %s93, %s96
    %p102 = scmp.eq.s32.totalorder %s10, 0
    %p103 = por %p101, %p102
    %p104 = scmp.ne.s32.totalorder %s93, %s96
    %p105 = scmp.eq.s32.totalorder %s15, 1
    %p106 = por %p104, %p105
    %p107 = scmp.ne.s32.totalorder %s96, %s97
    %p108 = scmp.eq.s32.totalorder %s15, 0
    %p109 = por %p107, %p108
    %p110 = scmp.ne.s32.totalorder %s96, %s97
    %p111 = scmp.eq.s32.totalorder %s16, 1
    %p112 = por %p110, %p111
    %p114 = scmp.ne.s32.totalorder %s97, %s113
    %p115 = scmp.eq.s32.totalorder %s16, 0
    %p116 = por %p114, %p115
    %p117 = scmp.le.s32.totalorder 1, %s10
    %p118 = scmp.lt.s32.totalorder %s10, 3
    %p119 = pnand %p117, %p118
    %p120 = pneg %p119
    // Predicated region
    $region9: #{conv2d_transpose_bn_relu.2} parent=5 // pred_check
      _
    $region10: #{conv2d_transpose_bn_relu.2} parent=5 // pred_check_branch
      %122 = sbr.rel (%p119) target = $region12
    $region11: #{conv2d_transpose_bn_relu.2} parent=5 // pred_region
      %s123 = ssub.s32 %s10, 1
      // Predicated region
      $region13: #{conv2d_transpose_bn_relu.2} parent=11 // pred_check
        %p124 = pneg %p57
      $region14: #{conv2d_transpose_bn_relu.2} parent=11 // pred_check_branch
        %126 = sbr.rel (%p124) target = $region16
      $region15: #{conv2d_transpose_bn_relu.2} parent=11 // pred_region
        _
      $region16: #{conv2d_transpose_bn_relu.2} parent=11 // pred_fallthru
        _
    $region12: #{conv2d_transpose_bn_relu.2} parent=5 // pred_fallthru
      _
    %p127 = scmp.lt.s32.totalorder %s10, 2
    // Predicated region
    $region17: #{conv2d_transpose_bn_relu.2} parent=5 // pred_check
      %p128 = pneg %p127
    $region18: #{conv2d_transpose_bn_relu.2} parent=5 // pred_check_branch
      %130 = sbr.rel (%p128) target = $region20
    $region19: #{conv2d_transpose_bn_relu.2} parent=5 // pred_region
      // Predicated region
      $region21: #{conv2d_transpose_bn_relu.2} parent=19 // pred_check
        %p131 = pneg %p30
      $region22: #{conv2d_transpose_bn_relu.2} parent=19 // pred_check_branch
        %133 = sbr.rel (%p131) target = $region24
      $region23: #{conv2d_transpose_bn_relu.2} parent=19 // pred_region
        %p134 = scmp.lt.s32.totalorder %s10, 1
        %s135 = scalar_select %p134, %s10, 1
        %s136 = smul.addr %s135, 10
        %s137 = smul.addr %s136, 8
        %s138 = scalar_lea.vmem %s0, %s137
      $region24: #{conv2d_transpose_bn_relu.2} parent=19 // pred_fallthru
        _
    $region20: #{conv2d_transpose_bn_relu.2} parent=5 // pred_fallthru
      _
    %p139 = scmp.le.s32.totalorder 1, %s10
    %p140 = scmp.lt.s32.totalorder %s10, 3
    %p141 = pnand %p139, %p140
    %p142 = pneg %p141
    // Predicated region
    $region25: #{conv2d_transpose_bn_relu.2} parent=5 // pred_check
      _
    $region26: #{conv2d_transpose_bn_relu.2} parent=5 // pred_check_branch
      %144 = sbr.rel (%p141) target = $region28
    $region27: #{conv2d_transpose_bn_relu.2} parent=5 // pred_region
      %s145 = ssub.s32 %s10, 1
      %p146 = scmp.lt.s32.totalorder %s15, 1
      %s147 = scalar_select %p146, %s15, 1
      %s148 = smul.addr %s147, 10
      %s149 = smul.addr %s148, 8
      %s150 = scalar_lea.vmem %s0, %s149
      %p151 = pneg %p36
      %p152 = pneg %p33
      %p153 = pneg %p57
      %p154 = pneg %p54
      %p155 = pneg %p83
      %p156 = pneg %p80
      %p157 = scmp.lt.s32.totalorder %s15, 1
      %s158 = scalar_select %p157, %s15, 1
      %s159 = smul.addr %s158, 2
      %s160 = scalar_lea.vmem %s2, %s159
      %p161 = pneg %p109
      %p162 = pneg %p106
      %p163 = scmp.lt.s32.totalorder %s15, 1
      %s164 = scalar_select %p163, %s15, 1
      %s165 = smul.addr %s164, 2
      %s166 = scalar_lea.vmem %s3, %s165
      %p167 = scmp.lt.s32.totalorder %s15, 1
      %s168 = scalar_select %p167, %s15, 1
      %s169 = smul.addr %s168, 10
      %s170 = smul.addr %s169, 8
      %s171 = scalar_lea.vmem %s0, %s170
      %p172 = scmp.lt.s32.totalorder %s15, 1
      %s173 = scalar_select %p172, %s15, 1
      %s174 = smul.addr %s173, 2
      %s175 = scalar_lea.vmem %s2, %s174
      %p176 = scmp.lt.s32.totalorder %s15, 1
      %s177 = scalar_select %p176, %s15, 1
      %s178 = smul.addr %s177, 2
      %s179 = scalar_lea.vmem %s3, %s178
      %v180 = vld [vmem:[%s171] sm:$0xff]
      %v181 = vld [vmem:[%s171 + $0x8] sm:$0xff]
      %v182 = vld [vmem:[%s171 + $0x10] sm:$0xff]
      %v183 = vld [vmem:[%s171 + $0x18] sm:$0xff]
      %v184 = vld [vmem:[%s171 + $0x20] sm:$0xff]
      %v185 = vld [vmem:[%s171 + $0x28] sm:$0xff]
      %v186 = vld [vmem:[%s171 + $0x30] sm:$0xff]
      %v187 = vld [vmem:[%s171 + $0x38] sm:$0xff]
      %v188 = vld [vmem:[%s171 + $0x40] sm:$0x7]
      %v189 = vld [vmem:[%s171 + $0x48] sm:$0x7]
      %v190 = vld [vmem:[%s1] sm:$0xff]
      %v191 = vld [vmem:[%s1 + $0x8] sm:$0xff]
      %v192 = vld [vmem:[%s1 + $0x10] sm:$0xff]
      %v193 = vld [vmem:[%s1 + $0x18] sm:$0xff]
      %v194 = vld [vmem:[%s1 + $0x20] sm:$0xff]
      %v195 = vld [vmem:[%s1 + $0x28] sm:$0xff]
      %v196 = vld [vmem:[%s1 + $0x30] sm:$0xff]
      %v197 = vld [vmem:[%s1 + $0x38] sm:$0xff]
      %v198 = vld [vmem:[%s1 + $0x40] sm:$0xff]
      %v199 = vld [vmem:[%s1 + $0x48] sm:$0xff]
      %v200 = vld [vmem:[%s1 + $0x50] sm:$0xff]
      %v201 = vld [vmem:[%s1 + $0x58] sm:$0xff]
      %v202 = vld [vmem:[%s1 + $0x60] sm:$0xff]
      %v203 = vld [vmem:[%s1 + $0x68] sm:$0xff]
      %v204 = vld [vmem:[%s1 + $0x70] sm:$0xff]
      %v205 = vld [vmem:[%s1 + $0x78] sm:$0xff]
      %v206 = vld [vmem:[%s1 + $0x80] sm:$0xff]
      %v207 = vld [vmem:[%s1 + $0x88] sm:$0xff]
      %v208 = vld [vmem:[%s1 + $0x90] sm:$0xff]
      %v209 = vld [vmem:[%s1 + $0x98] sm:$0xff]
      %v210 = vld [vmem:[%s1 + $0xa0] sm:$0xff]
      %v211 = vld [vmem:[%s1 + $0xa8] sm:$0xff]
      %v212 = vld [vmem:[%s1 + $0xb0] sm:$0xff]
      %v213 = vld [vmem:[%s1 + $0xb8] sm:$0xff]
      %v214 = vld [vmem:[%s1 + $0xc0] sm:$0xff]
      %v215 = vld [vmem:[%s1 + $0xc8] sm:$0xff]
      %v216 = vld [vmem:[%s1 + $0xd0] sm:$0xff]
      %v217 = vld [vmem:[%s1 + $0xd8] sm:$0xff]
      %v218 = vld [vmem:[%s1 + $0xe0] sm:$0xff]
      %v219 = vld [vmem:[%s1 + $0xe8] sm:$0xff]
      %v220 = vld [vmem:[%s1 + $0xf0] sm:$0xff]
      %v221 = vld [vmem:[%s1 + $0xf8] sm:$0xff]
      %v222 = vld [vmem:[%s1 + $0x100] sm:$0xff]
      %v223 = vld [vmem:[%s1 + $0x108] sm:$0xff]
      %v224 = vld [vmem:[%s1 + $0x110] sm:$0xf]
      %v225 = vld [vmem:[%s1 + $0x118] sm:$0xf]
      %v226 = vld [vmem:[%s1 + $0x120] sm:$0xff]
      %v227 = vld [vmem:[%s1 + $0x128] sm:$0xff]
      %v228 = vld [vmem:[%s1 + $0x130] sm:$0xff]
      %v229 = vld [vmem:[%s1 + $0x138] sm:$0xff]
      %v230 = vld [vmem:[%s1 + $0x140] sm:$0xff]
      %v231 = vld [vmem:[%s1 + $0x148] sm:$0xff]
      %v232 = vld [vmem:[%s1 + $0x150] sm:$0xff]
      %v233 = vld [vmem:[%s1 + $0x158] sm:$0xff]
      %v234 = vld [vmem:[%s1 + $0x160] sm:$0xff]
      %v235 = vld [vmem:[%s1 + $0x168] sm:$0xff]
      %v236 = vld [vmem:[%s1 + $0x170] sm:$0xff]
      %v237 = vld [vmem:[%s1 + $0x178] sm:$0xff]
      %v238 = vld [vmem:[%s1 + $0x180] sm:$0xff]
      %v239 = vld [vmem:[%s1 + $0x188] sm:$0xff]
      %v240 = vld [vmem:[%s1 + $0x190] sm:$0xff]
      %v241 = vld [vmem:[%s1 + $0x198] sm:$0xff]
      %v242 = vld [vmem:[%s1 + $0x1a0] sm:$0xff]
      %v243 = vld [vmem:[%s1 + $0x1a8] sm:$0xff]
      %v244 = vld [vmem:[%s1 + $0x1b0] sm:$0xff]
      %v245 = vld [vmem:[%s1 + $0x1b8] sm:$0xff]
      %v246 = vld [vmem:[%s1 + $0x1c0] sm:$0xff]
      %v247 = vld [vmem:[%s1 + $0x1c8] sm:$0xff]
      %v248 = vld [vmem:[%s1 + $0x1d0] sm:$0xff]
      %v249 = vld [vmem:[%s1 + $0x1d8] sm:$0xff]
      %v250 = vld [vmem:[%s1 + $0x1e0] sm:$0xff]
      %v251 = vld [vmem:[%s1 + $0x1e8] sm:$0xff]
      %v252 = vld [vmem:[%s1 + $0x1f0] sm:$0xff]
      %v253 = vld [vmem:[%s1 + $0x1f8] sm:$0xff]
      %v254 = vld [vmem:[%s1 + $0x200] sm:$0xff]
      %v255 = vld [vmem:[%s1 + $0x208] sm:$0xff]
      %v256 = vld [vmem:[%s1 + $0x210] sm:$0xff]
      %v257 = vld [vmem:[%s1 + $0x218] sm:$0xff]
      %v258 = vld [vmem:[%s1 + $0x220] sm:$0xff]
      %v259 = vld [vmem:[%s1 + $0x228] sm:$0xff]
      %v260 = vld [vmem:[%s1 + $0x230] sm:$0xf]
      %v261 = vld [vmem:[%s1 + $0x238] sm:$0xf]
      %v262 = vld [vmem:[%s1 + $0x240] sm:$0xff]
      %v263 = vld [vmem:[%s1 + $0x248] sm:$0xff]
      %v264 = vld [vmem:[%s1 + $0x250] sm:$0xff]
      %v265 = vld [vmem:[%s1 + $0x258] sm:$0xff]
      %v266 = vld [vmem:[%s1 + $0x260] sm:$0xff]
      %v267 = vld [vmem:[%s1 + $0x268] sm:$0xff]
      %v268 = vld [vmem:[%s1 + $0x270] sm:$0xff]
      %v269 = vld [vmem:[%s1 + $0x278] sm:$0xff]
      %v270 = vld [vmem:[%s1 + $0x280] sm:$0xff]
      %v271 = vld [vmem:[%s1 + $0x288] sm:$0xff]
      %v272 = vld [vmem:[%s1 + $0x290] sm:$0xff]
      %v273 = vld [vmem:[%s1 + $0x298] sm:$0xff]
      %v274 = vld [vmem:[%s1 + $0x2a0] sm:$0xff]
      %v275 = vld [vmem:[%s1 + $0x2a8] sm:$0xff]
      %v276 = vld [vmem:[%s1 + $0x2b0] sm:$0xff]
      %v277 = vld [vmem:[%s1 + $0x2b8] sm:$0xff]
      %v278 = vld [vmem:[%s1 + $0x2c0] sm:$0xff]
      %v279 = vld [vmem:[%s1 + $0x2c8] sm:$0xff]
      %v280 = vld [vmem:[%s1 + $0x2d0] sm:$0xff]
      %v281 = vld [vmem:[%s1 + $0x2d8] sm:$0xff]
      %v282 = vld [vmem:[%s1 + $0x2e0] sm:$0xff]
      %v283 = vld [vmem:[%s1 + $0x2e8] sm:$0xff]
      %v284 = vld [vmem:[%s1 + $0x2f0] sm:$0xff]
      %v285 = vld [vmem:[%s1 + $0x2f8] sm:$0xff]
      %v286 = vld [vmem:[%s1 + $0x300] sm:$0xff]
      %v287 = vld [vmem:[%s1 + $0x308] sm:$0xff]
      %v288 = vld [vmem:[%s1 + $0x310] sm:$0xff]
      %v289 = vld [vmem:[%s1 + $0x318] sm:$0xff]
      %v290 = vld [vmem:[%s1 + $0x320] sm:$0xff]
      %v291 = vld [vmem:[%s1 + $0x328] sm:$0xff]
      %v292 = vld [vmem:[%s1 + $0x330] sm:$0xff]
      %v293 = vld [vmem:[%s1 + $0x338] sm:$0xff]
      %v294 = vld [vmem:[%s1 + $0x340] sm:$0xff]
      %v295 = vld [vmem:[%s1 + $0x348] sm:$0xff]
      %v296 = vld [vmem:[%s1 + $0x350] sm:$0xf]
      %v297 = vld [vmem:[%s1 + $0x358] sm:$0xf]
      %v298 = vld [vmem:[%s1 + $0x360] sm:$0xff]
      %v299 = vld [vmem:[%s1 + $0x368] sm:$0xff]
      %v300 = vld [vmem:[%s1 + $0x370] sm:$0xff]
      %v301 = vld [vmem:[%s1 + $0x378] sm:$0xff]
      %v302 = vld [vmem:[%s1 + $0x380] sm:$0xff]
      %v303 = vld [vmem:[%s1 + $0x388] sm:$0xff]
      %v304 = vld [vmem:[%s1 + $0x390] sm:$0xff]
      %v305 = vld [vmem:[%s1 + $0x398] sm:$0xff]
      %v306 = vld [vmem:[%s1 + $0x3a0] sm:$0xff]
      %v307 = vld [vmem:[%s1 + $0x3a8] sm:$0xff]
      %v308 = vld [vmem:[%s1 + $0x3b0] sm:$0xff]
      %v309 = vld [vmem:[%s1 + $0x3b8] sm:$0xff]
      %v310 = vld [vmem:[%s1 + $0x3c0] sm:$0xff]
      %v311 = vld [vmem:[%s1 + $0x3c8] sm:$0xff]
      %v312 = vld [vmem:[%s1 + $0x3d0] sm:$0xff]
      %v313 = vld [vmem:[%s1 + $0x3d8] sm:$0xff]
      %v314 = vld [vmem:[%s1 + $0x3e0] sm:$0xff]
      %v315 = vld [vmem:[%s1 + $0x3e8] sm:$0xff]
      %v316 = vld [vmem:[%s1 + $0x3f0] sm:$0xff]
      %v317 = vld [vmem:[%s1 + $0x3f8] sm:$0xff]
      %v318 = vld [vmem:[%s1 + $0x400] sm:$0xff]
      %v319 = vld [vmem:[%s1 + $0x408] sm:$0xff]
      %v320 = vld [vmem:[%s1 + $0x410] sm:$0xff]
      %v321 = vld [vmem:[%s1 + $0x418] sm:$0xff]
      %v322 = vld [vmem:[%s1 + $0x420] sm:$0xff]
      %v323 = vld [vmem:[%s1 + $0x428] sm:$0xff]
      %v324 = vld [vmem:[%s1 + $0x430] sm:$0xff]
      %v325 = vld [vmem:[%s1 + $0x438] sm:$0xff]
      %v326 = vld [vmem:[%s1 + $0x440] sm:$0xff]
      %v327 = vld [vmem:[%s1 + $0x448] sm:$0xff]
      %v328 = vld [vmem:[%s1 + $0x450] sm:$0xff]
      %v329 = vld [vmem:[%s1 + $0x458] sm:$0xff]
      %v330 = vld [vmem:[%s1 + $0x460] sm:$0xff]
      %v331 = vld [vmem:[%s1 + $0x468] sm:$0xff]
      %v332 = vld [vmem:[%s1 + $0x470] sm:$0xf]
      %v333 = vld [vmem:[%s1 + $0x478] sm:$0xf]
      %vm344 = vcmask 1046528
      %v345 = vrot.slane %v180, 1
      %v346 = vrot.slane %v182, 1
      %v347 = vsel %vm344, %v345, %v346
      %v348 = vrot.slane %v181, 1
      %v349 = vrot.slane %v183, 1
      %v350 = vsel %vm344, %v348, %v349
      %v351 = vrot.slane %v184, 1
      %v352 = vsel %vm344, %v346, %v351
      %v353 = vrot.slane %v185, 1
      %v354 = vsel %vm344, %v349, %v353
      %v355 = vrot.slane %v186, 1
      %v356 = vsel %vm344, %v351, %v355
      %v357 = vrot.slane %v187, 1
      %v358 = vsel %vm344, %v353, %v357
      %v359 = vrot.slane %v188, 1
      %v360 = vsel %vm344, %v355, %v359
      %v361 = vrot.slane %v189, 1
      %v362 = vsel %vm344, %v357, %v361
      %vm367 = vcmask 97280
      %v368 = vsel %vm367, %v350, 0
      %v370 = vsel %vm367, %v354, 0
      %v372 = vsel %vm367, %v358, 0
      %v374 = vsel %vm367, %v362, 0
      %vm376 = vcmask 1043456
      %v378 = vsel %vm376, %v260, 0
      %v381 = vsel %vm376, %v261, 0
      %383 = vmatprep.subr.mxu0 %v227
      %384 = vmatpush1.msra.mxu0 %v226
      %385 = vmatprep.subr.mxu0 %v229
      %386 = vmatpush1.msra.mxu0 %v228
      %387 = vmatprep.subr.mxu0 %v231
      %388 = vmatpush1.msra.mxu0 %v230
      %389 = vmatprep.subr.mxu0 %v233
      %390 = vmatpush1.msra.mxu0 %v232
      %391 = vmatprep.subr.mxu0 %v235
      %392 = vmatpush1.msra.mxu0 %v234
      %393 = vmatprep.subr.mxu0 %v237
      %394 = vmatpush1.msra.mxu0 %v236
      %395 = vmatprep.subr.mxu0 %v239
      %396 = vmatpush1.msra.mxu0 %v238
      %397 = vmatprep.subr.mxu0 %v241
      %398 = vmatpush1.msra.mxu0 %v240
      %399 = vmatprep.subr.mxu0 %v243
      %400 = vmatpush1.msra.mxu0 %v242
      %401 = vmatprep.subr.mxu0 %v245
      %402 = vmatpush1.msra.mxu0 %v244
      %403 = vmatprep.subr.mxu0 %v247
      %404 = vmatpush1.msra.mxu0 %v246
      %405 = vmatprep.subr.mxu0 %v249
      %406 = vmatpush1.msra.mxu0 %v248
      %407 = vmatprep.subr.mxu0 %v251
      %408 = vmatpush1.msra.mxu0 %v250
      %409 = vmatprep.subr.mxu0 %v253
      %410 = vmatpush1.msra.mxu0 %v252
      %411 = vmatprep.subr.mxu0 %v255
      %412 = vmatpush1.msra.mxu0 %v254
      %413 = vmatprep.subr.mxu0 %v257
      %414 = vmatpush1.msra.mxu0 %v256
      %415 = vmatprep.subr.mxu0 %v259
      %416 = vmatpush1.msra.mxu0 %v258
      %417 = vmatprep.subr.mxu0 %v381
      %418 = vmatpush1.msra.mxu0 %v378
      %419 = vmatprep.subr.mxu0 0.0
      %420 = vmatpush1.msra.mxu0 0.0
      %421 = vmatprep.subr.mxu0 0.0
      %422 = vmatpush1.msra.mxu0 0.0
      %423 = vmatprep.subr.mxu0 0.0
      %424 = vmatpush1.msra.mxu0 0.0
      %425 = vmatprep.subr.mxu0 0.0
      %426 = vmatpush1.msra.mxu0 0.0
      %427 = vmatprep.subr.mxu0 0.0
      %428 = vmatpush1.msra.mxu0 0.0
      %429 = vmatprep.subr.mxu0 0.0
      %430 = vmatpush1.msra.mxu0 0.0
      %431 = vmatprep.subr.mxu0 0.0
      %432 = vmatpush1.msra.mxu0 0.0
      %433 = vmatprep.subr.mxu0 0.0
      %434 = vmatpush1.msra.mxu0 0.0
      %435 = vmatprep.subr.mxu0 0.0
      %436 = vmatpush1.msra.mxu0 0.0
      %437 = vmatprep.subr.mxu0 0.0
      %438 = vmatpush1.msra.mxu0 0.0
      %439 = vmatprep.subr.mxu0 0.0
      %440 = vmatpush1.msra.mxu0 0.0
      %441 = vmatprep.subr.mxu0 0.0
      %442 = vmatpush1.msra.mxu0 0.0
      %443 = vmatprep.subr.mxu0 0.0
      %444 = vmatpush1.msra.mxu0 0.0
      %445 = vmatprep.subr.mxu0 0.0
      %446 = vmatpush1.msra.mxu0 0.0
      %447 = vmatprep.mubr.f32.mxu0 %v368
      %448 = vmatmul.mubr.f32.gmra.mrb[0].mxu0 %v347
      %v449 = vpop.f32.mrb[0].mxu0
      %v450 = vadd.f32 0.0, %v449
      %v451 = vpop.f32.mrb[0].mxu0
      %v452 = vadd.f32 0.0, %v451
      %453 = vmatprep.mubr.f32.mxu0 %v370
      %454 = vmatmul.mubr.f32.gmra.mrb[0].mxu0 %v352
      %v455 = vpop.f32.mrb[0].mxu0
      %v456 = vadd.f32 0.0, %v455
      %v457 = vpop.f32.mrb[0].mxu0
      %v458 = vadd.f32 0.0, %v457
      %459 = vmatprep.mubr.f32.mxu0 %v372
      %460 = vmatmul.mubr.f32.gmra.mrb[0].mxu0 %v356
      %v461 = vpop.f32.mrb[0].mxu0
      %v462 = vadd.f32 0.0, %v461
      %v463 = vpop.f32.mrb[0].mxu0
      %v464 = vadd.f32 0.0, %v463
      %465 = vmatprep.mubr.f32.mxu0 %v374
      %466 = vmatmul.mubr.f32.gmra.mrb[0].mxu0 %v360
      %v467 = vpop.f32.mrb[0].mxu0
      %v468 = vadd.f32 0.0, %v467
      %v469 = vpop.f32.mrb[0].mxu0
      %v470 = vadd.f32 0.0, %v469
      %471 = vdwg.mxu0
      %v472 = vsel %vm367, %v181, 0
      %v474 = vsel %vm367, %v183, 0
      %v476 = vsel %vm367, %v185, 0
      %v478 = vsel %vm367, %v187, 0
      %v481 = vsel %vm376, %v224, 0
      %v484 = vsel %vm376, %v225, 0
      %486 = vmatprep.subr.mxu0 %v191
      %487 = vmatpush1.msra.mxu0 %v190
      %488 = vmatprep.subr.mxu0 %v193
      %489 = vmatpush1.msra.mxu0 %v192
      %490 = vmatprep.subr.mxu0 %v195
      %491 = vmatpush1.msra.mxu0 %v194
      %492 = vmatprep.subr.mxu0 %v197
      %493 = vmatpush1.msra.mxu0 %v196
      %494 = vmatprep.subr.mxu0 %v199
      %495 = vmatpush1.msra.mxu0 %v198
      %496 = vmatprep.subr.mxu0 %v201
      %497 = vmatpush1.msra.mxu0 %v200
      %498 = vmatprep.subr.mxu0 %v203
      %499 = vmatpush1.msra.mxu0 %v202
      %500 = vmatprep.subr.mxu0 %v205
      %501 = vmatpush1.msra.mxu0 %v204
      %502 = vmatprep.subr.mxu0 %v207
      %503 = vmatpush1.msra.mxu0 %v206
      %504 = vmatprep.subr.mxu0 %v209
      %505 = vmatpush1.msra.mxu0 %v208
      %506 = vmatprep.subr.mxu0 %v211
      %507 = vmatpush1.msra.mxu0 %v210
      %508 = vmatprep.subr.mxu0 %v213
      %509 = vmatpush1.msra.mxu0 %v212
      %510 = vmatprep.subr.mxu0 %v215
      %511 = vmatpush1.msra.mxu0 %v214
      %512 = vmatprep.subr.mxu0 %v217
      %513 = vmatpush1.msra.mxu0 %v216
      %514 = vmatprep.subr.mxu0 %v219
      %515 = vmatpush1.msra.mxu0 %v218
      %516 = vmatprep.subr.mxu0 %v221
      %517 = vmatpush1.msra.mxu0 %v220
      %518 = vmatprep.subr.mxu0 %v223
      %519 = vmatpush1.msra.mxu0 %v222
      %520 = vmatprep.subr.mxu0 %v484
      %521 = vmatpush1.msra.mxu0 %v481
      %522 = vmatprep.subr.mxu0 0.0
      %523 = vmatpush1.msra.mxu0 0.0
      %524 = vmatprep.subr.mxu0 0.0
      %525 = vmatpush1.msra.mxu0 0.0
      %526 = vmatprep.subr.mxu0 0.0
      %527 = vmatpush1.msra.mxu0 0.0
      %528 = vmatprep.subr.mxu0 0.0
      %529 = vmatpush1.msra.mxu0 0.0
      %530 = vmatprep.subr.mxu0 0.0
      %531 = vmatpush1.msra.mxu0 0.0
      %532 = vmatprep.subr.mxu0 0.0
      %533 = vmatpush1.msra.mxu0 0.0
      %534 = vmatprep.subr.mxu0 0.0
      %535 = vmatpush1.msra.mxu0 0.0
      %536 = vmatprep.subr.mxu0 0.0
      %537 = vmatpush1.msra.mxu0 0.0
      %538 = vmatprep.subr.mxu0 0.0
      %539 = vmatpush1.msra.mxu0 0.0
      %540 = vmatprep.subr.mxu0 0.0
      %541 = vmatpush1.msra.mxu0 0.0
      %542 = vmatprep.subr.mxu0 0.0
      %543 = vmatpush1.msra.mxu0 0.0
      %544 = vmatprep.subr.mxu0 0.0
      %545 = vmatpush1.msra.mxu0 0.0
      %546 = vmatprep.subr.mxu0 0.0
      %547 = vmatpush1.msra.mxu0 0.0
      %548 = vmatprep.subr.mxu0 0.0
      %549 = vmatpush1.msra.mxu0 0.0
      %550 = vmatprep.mubr.f32.mxu0 %v472
      %551 = vmatmul.mubr.f32.gmra.mrb[0].mxu0 %v180
      %v552 = vpop.f32.mrb[0].mxu0
      %v553 = vadd.f32 %v450, %v552
      %v554 = vpop.f32.mrb[0].mxu0
      %v555 = vadd.f32 %v452, %v554
      %556 = vmatprep.mubr.f32.mxu0 %v474
      %557 = vmatmul.mubr.f32.gmra.mrb[0].mxu0 %v182
      %v558 = vpop.f32.mrb[0].mxu0
      %v559 = vadd.f32 %v456, %v558
      %v560 = vpop.f32.mrb[0].mxu0
      %v561 = vadd.f32 %v458, %v560
      %562 = vmatprep.mubr.f32.mxu0 %v476
      %563 = vmatmul.mubr.f32.gmra.mrb[0].mxu0 %v184
      %v564 = vpop.f32.mrb[0].mxu0
      %v565 = vadd.f32 %v462, %v564
      %v566 = vpop.f32.mrb[0].mxu0
      %v567 = vadd.f32 %v464, %v566
      %568 = vmatprep.mubr.f32.mxu0 %v478
      %569 = vmatmul.mubr.f32.gmra.mrb[0].mxu0 %v186
      %v570 = vpop.f32.mrb[0].mxu0
      %v571 = vadd.f32 %v468, %v570
      %v572 = vpop.f32.mrb[0].mxu0
      %v573 = vadd.f32 %v470, %v572
      %574 = vdwg.mxu0
      %vm575 = vcmask 1045504
      %v576 = vrot.slane %v180, 2
      %v577 = vrot.slane %v182, 2
      %v578 = vsel %vm575, %v576, %v577
      %v579 = vrot.slane %v181, 2
      %v580 = vrot.slane %v183, 2
      %v581 = vsel %vm575, %v579, %v580
      %v582 = vrot.slane %v184, 2
      %v583 = vsel %vm575, %v577, %v582
      %v584 = vrot.slane %v185, 2
      %v585 = vsel %vm575, %v580, %v584
      %v586 = vrot.slane %v186, 2
      %v587 = vsel %vm575, %v582, %v586
      %v588 = vrot.slane %v187, 2
      %v589 = vsel %vm575, %v584, %v588
      %v590 = vrot.slane %v188, 2
      %v591 = vsel %vm575, %v586, %v590
      %v592 = vrot.slane %v189, 2
      %v593 = vsel %vm575, %v588, %v592
      %v598 = vsel %vm367, %v581, 0
      %v600 = vsel %vm367, %v585, 0
      %v602 = vsel %vm367, %v589, 0
      %v604 = vsel %vm367, %v593, 0
      %v607 = vsel %vm376, %v296, 0
      %v610 = vsel %vm376, %v297, 0
      %612 = vmatprep.subr.mxu0 %v263
      %613 = vmatpush1.msra.mxu0 %v262
      %614 = vmatprep.subr.mxu0 %v265
      %615 = vmatpush1.msra.mxu0 %v264
      %616 = vmatprep.subr.mxu0 %v267
      %617 = vmatpush1.msra.mxu0 %v266
      %618 = vmatprep.subr.mxu0 %v269
      %619 = vmatpush1.msra.mxu0 %v268
      %620 = vmatprep.subr.mxu0 %v271
      %621 = vmatpush1.msra.mxu0 %v270
      %622 = vmatprep.subr.mxu0 %v273
      %623 = vmatpush1.msra.mxu0 %v272
      %624 = vmatprep.subr.mxu0 %v275
      %625 = vmatpush1.msra.mxu0 %v274
      %626 = vmatprep.subr.mxu0 %v277
      %627 = vmatpush1.msra.mxu0 %v276
      %628 = vmatprep.subr.mxu0 %v279
      %629 = vmatpush1.msra.mxu0 %v278
      %630 = vmatprep.subr.mxu0 %v281
      %631 = vmatpush1.msra.mxu0 %v280
      %632 = vmatprep.subr.mxu0 %v283
      %633 = vmatpush1.msra.mxu0 %v282
      %634 = vmatprep.subr.mxu0 %v285
      %635 = vmatpush1.msra.mxu0 %v284
      %636 = vmatprep.subr.mxu0 %v287
      %637 = vmatpush1.msra.mxu0 %v286
      %638 = vmatprep.subr.mxu0 %v289
      %639 = vmatpush1.msra.mxu0 %v288
      %640 = vmatprep.subr.mxu0 %v291
      %641 = vmatpush1.msra.mxu0 %v290
      %642 = vmatprep.subr.mxu0 %v293
      %643 = vmatpush1.msra.mxu0 %v292
      %644 = vmatprep.subr.mxu0 %v295
      %645 = vmatpush1.msra.mxu0 %v294
      %646 = vmatprep.subr.mxu0 %v610
      %647 = vmatpush1.msra.mxu0 %v607
      %648 = vmatprep.subr.mxu0 0.0
      %649 = vmatpush1.msra.mxu0 0.0
      %650 = vmatprep.subr.mxu0 0.0
      %651 = vmatpush1.msra.mxu0 0.0
      %652 = vmatprep.subr.mxu0 0.0
      %653 = vmatpush1.msra.mxu0 0.0
      %654 = vmatprep.subr.mxu0 0.0
      %655 = vmatpush1.msra.mxu0 0.0
      %656 = vmatprep.subr.mxu0 0.0
      %657 = vmatpush1.msra.mxu0 0.0
      %658 = vmatprep.subr.mxu0 0.0
      %659 = vmatpush1.msra.mxu0 0.0
      %660 = vmatprep.subr.mxu0 0.0
      %661 = vmatpush1.msra.mxu0 0.0
      %662 = vmatprep.subr.mxu0 0.0
      %663 = vmatpush1.msra.mxu0 0.0
      %664 = vmatprep.subr.mxu0 0.0
      %665 = vmatpush1.msra.mxu0 0.0
      %666 = vmatprep.subr.mxu0 0.0
      %667 = vmatpush1.msra.mxu0 0.0
      %668 = vmatprep.subr.mxu0 0.0
      %669 = vmatpush1.msra.mxu0 0.0
      %670 = vmatprep.subr.mxu0 0.0
      %671 = vmatpush1.msra.mxu0 0.0
      %672 = vmatprep.subr.mxu0 0.0
      %673 = vmatpush1.msra.mxu0 0.0
      %674 = vmatprep.subr.mxu0 0.0
      %675 = vmatpush1.msra.mxu0 0.0
      %676 = vmatprep.mubr.f32.mxu0 %v598
      %677 = vmatmul.mubr.f32.gmra.mrb[0].mxu0 %v578
      %v678 = vpop.f32.mrb[0].mxu0
      %v679 = vadd.f32 0.0, %v678
      %v680 = vpop.f32.mrb[0].mxu0
      %v681 = vadd.f32 0.0, %v680
      %682 = vmatprep.mubr.f32.mxu0 %v600
      %683 = vmatmul.mubr.f32.gmra.mrb[0].mxu0 %v583
      %v684 = vpop.f32.mrb[0].mxu0
      %v685 = vadd.f32 0.0, %v684
      %v686 = vpop.f32.mrb[0].mxu0
      %v687 = vadd.f32 0.0, %v686
      %688 = vmatprep.mubr.f32.mxu0 %v602
      %689 = vmatmul.mubr.f32.gmra.mrb[0].mxu0 %v587
      %v690 = vpop.f32.mrb[0].mxu0
      %v691 = vadd.f32 0.0, %v690
      %v692 = vpop.f32.mrb[0].mxu0
      %v693 = vadd.f32 0.0, %v692
      %694 = vmatprep.mubr.f32.mxu0 %v604
      %695 = vmatmul.mubr.f32.gmra.mrb[0].mxu0 %v591
      %v696 = vpop.f32.mrb[0].mxu0
      %v697 = vadd.f32 0.0, %v696
      %v698 = vpop.f32.mrb[0].mxu0
      %v699 = vadd.f32 0.0, %v698
      %700 = vdwg.mxu0
      %v701 = vadd.f32 %v553, %v679
      %v702 = vadd.f32 %v555, %v681
      %v703 = vadd.f32 %v559, %v685
      %v704 = vadd.f32 %v561, %v687
      %v705 = vadd.f32 %v565, %v691
      %v706 = vadd.f32 %v567, %v693
      %v707 = vadd.f32 %v571, %v697
      %v708 = vadd.f32 %v573, %v699
      %vm709 = vcmask 1044480
      %v710 = vrot.slane %v180, 3
      %v711 = vrot.slane %v182, 3
      %v712 = vsel %vm709, %v710, %v711
      %v713 = vrot.slane %v181, 3
      %v714 = vrot.slane %v183, 3
      %v715 = vsel %vm709, %v713, %v714
      %v716 = vrot.slane %v184, 3
      %v717 = vsel %vm709, %v711, %v716
      %v718 = vrot.slane %v185, 3
      %v719 = vsel %vm709, %v714, %v718
      %v720 = vrot.slane %v186, 3
      %v721 = vsel %vm709, %v716, %v720
      %v722 = vrot.slane %v187, 3
      %v723 = vsel %vm709, %v718, %v722
      %v724 = vrot.slane %v188, 3
      %v725 = vsel %vm709, %v720, %v724
      %v726 = vrot.slane %v189, 3
      %v727 = vsel %vm709, %v722, %v726
      %v732 = vsel %vm367, %v715, 0
      %v734 = vsel %vm367, %v719, 0
      %v736 = vsel %vm367, %v723, 0
      %v738 = vsel %vm367, %v727, 0
      %v741 = vsel %vm376, %v332, 0
      %v744 = vsel %vm376, %v333, 0
      %746 = vmatprep.subr.mxu0 %v299
      %747 = vmatpush1.msra.mxu0 %v298
      %748 = vmatprep.subr.mxu0 %v301
      %749 = vmatpush1.msra.mxu0 %v300
      %750 = vmatprep.subr.mxu0 %v303
      %751 = vmatpush1.msra.mxu0 %v302
      %752 = vmatprep.subr.mxu0 %v305
      %753 = vmatpush1.msra.mxu0 %v304
      %754 = vmatprep.subr.mxu0 %v307
      %755 = vmatpush1.msra.mxu0 %v306
      %756 = vmatprep.subr.mxu0 %v309
      %757 = vmatpush1.msra.mxu0 %v308
      %758 = vmatprep.subr.mxu0 %v311
      %759 = vmatpush1.msra.mxu0 %v310
      %760 = vmatprep.subr.mxu0 %v313
      %761 = vmatpush1.msra.mxu0 %v312
      %762 = vmatprep.subr.mxu0 %v315
      %763 = vmatpush1.msra.mxu0 %v314
      %764 = vmatprep.subr.mxu0 %v317
      %765 = vmatpush1.msra.mxu0 %v316
      %766 = vmatprep.subr.mxu0 %v319
      %767 = vmatpush1.msra.mxu0 %v318
      %768 = vmatprep.subr.mxu0 %v321
      %769 = vmatpush1.msra.mxu0 %v320
      %770 = vmatprep.subr.mxu0 %v323
      %771 = vmatpush1.msra.mxu0 %v322
      %772 = vmatprep.subr.mxu0 %v325
      %773 = vmatpush1.msra.mxu0 %v324
      %774 = vmatprep.subr.mxu0 %v327
      %775 = vmatpush1.msra.mxu0 %v326
      %776 = vmatprep.subr.mxu0 %v329
      %777 = vmatpush1.msra.mxu0 %v328
      %778 = vmatprep.subr.mxu0 %v331
      %779 = vmatpush1.msra.mxu0 %v330
      %780 = vmatprep.subr.mxu0 %v744
      %781 = vmatpush1.msra.mxu0 %v741
      %782 = vmatprep.subr.mxu0 0.0
      %783 = vmatpush1.msra.mxu0 0.0
      %784 = vmatprep.subr.mxu0 0.0
      %785 = vmatpush1.msra.mxu0 0.0
      %786 = vmatprep.subr.mxu0 0.0
      %787 = vmatpush1.msra.mxu0 0.0
      %788 = vmatprep.subr.mxu0 0.0
      %789 = vmatpush1.msra.mxu0 0.0
      %790 = vmatprep.subr.mxu0 0.0
      %791 = vmatpush1.msra.mxu0 0.0
      %792 = vmatprep.subr.mxu0 0.0
      %793 = vmatpush1.msra.mxu0 0.0
      %794 = vmatprep.subr.mxu0 0.0
      %795 = vmatpush1.msra.mxu0 0.0
      %796 = vmatprep.subr.mxu0 0.0
      %797 = vmatpush1.msra.mxu0 0.0
      %798 = vmatprep.subr.mxu0 0.0
      %799 = vmatpush1.msra.mxu0 0.0
      %800 = vmatprep.subr.mxu0 0.0
      %801 = vmatpush1.msra.mxu0 0.0
      %802 = vmatprep.subr.mxu0 0.0
      %803 = vmatpush1.msra.mxu0 0.0
      %804 = vmatprep.subr.mxu0 0.0
      %805 = vmatpush1.msra.mxu0 0.0
      %806 = vmatprep.subr.mxu0 0.0
      %807 = vmatpush1.msra.mxu0 0.0
      %808 = vmatprep.subr.mxu0 0.0
      %809 = vmatpush1.msra.mxu0 0.0
      %810 = vmatprep.mubr.f32.mxu0 %v732
      %811 = vmatmul.mubr.f32.gmra.mrb[0].mxu0 %v712
      %v812 = vpop.f32.mrb[0].mxu0
      %v813 = vadd.f32 0.0, %v812
      %v814 = vpop.f32.mrb[0].mxu0
      %v815 = vadd.f32 0.0, %v814
      %816 = vmatprep.mubr.f32.mxu0 %v734
      %817 = vmatmul.mubr.f32.gmra.mrb[0].mxu0 %v717
      %v818 = vpop.f32.mrb[0].mxu0
      %v819 = vadd.f32 0.0, %v818
      %v820 = vpop.f32.mrb[0].mxu0
      %v821 = vadd.f32 0.0, %v820
      %822 = vmatprep.mubr.f32.mxu0 %v736
      %823 = vmatmul.mubr.f32.gmra.mrb[0].mxu0 %v721
      %v824 = vpop.f32.mrb[0].mxu0
      %v825 = vadd.f32 0.0, %v824
      %v826 = vpop.f32.mrb[0].mxu0
      %v827 = vadd.f32 0.0, %v826
      %828 = vmatprep.mubr.f32.mxu0 %v738
      %829 = vmatmul.mubr.f32.gmra.mrb[0].mxu0 %v725
      %v830 = vpop.f32.mrb[0].mxu0
      %v831 = vadd.f32 0.0, %v830
      %v832 = vpop.f32.mrb[0].mxu0
      %v833 = vadd.f32 0.0, %v832
      %834 = vdwg.mxu0
      %v835 = vadd.f32 %v701, %v813
      %v836 = vadd.f32 %v702, %v815
      %v837 = vadd.f32 %v703, %v819
      %v838 = vadd.f32 %v704, %v821
      %v839 = vadd.f32 %v705, %v825
      %v840 = vadd.f32 %v706, %v827
      %v841 = vadd.f32 %v707, %v831
      %v842 = vadd.f32 %v708, %v833
      %v843 = vadd.f32 %v835, %v837
      %v844 = vadd.f32 %v843, %v839
      %v845 = vadd.f32 %v844, %v841
      %v846 = vrot.slane %v845, 4
      %v847 = vadd.f32 %v845, %v846
      %v848 = vrot.slane %v847, 2
      %v849 = vadd.f32 %v847, %v848
      %v850 = vrot.slane %v849, 1
      %v851 = vadd.f32 %v849, %v850
      %v852 = vadd.f32 %v836, %v838
      %v853 = vadd.f32 %v852, %v840
      %v854 = vadd.f32 %v853, %v842
      %v855 = vrot.slane %v854, 4
      %v856 = vadd.f32 %v854, %v855
      %v857 = vrot.slane %v856, 2
      %v858 = vadd.f32 %v856, %v857
      %v859 = vrot.slane %v858, 1
      %v860 = vadd.f32 %v858, %v859
      %v863 = vcombine.low %v851, %v860
      %v865 = vunpack.c.l.s4 1966171168
      %v866 = vunpack.c.0.s8 %v865
      %v867 = vlaneseq
      %v868 = vshrl.u32 %v867, 7
      %v869 = vsub.s32 %v866, %v868
      %v870 = vrot.slane %v863, %v869
      %v872 = vunpack.c.l.s4 1966171168
      %v873 = vunpack.c.0.s8 %v872
      %v874 = vlaneseq
      %v875 = vshrl.u32 %v874, 7
      %v876 = vsub.s32 %v873, %v875
      %v877 = vrot.slane %v870, %v876
      %v879 = vlaneseq
      %vm880 = vcmp.ge.s32.totalorder %v879, 0
      %vm881 = vcmp.lt.s32.totalorder %v879, 256
      %vm882 = vmand %vm880, %vm881
      %883 = vst.msk [vmem:[%s175] sm:$0x3] %vm882, %v877
      %v884 = vmul.f32 %v835, %v835
      %v885 = vmul.f32 %v836, %v836
      %v886 = vmul.f32 %v837, %v837
      %v887 = vmul.f32 %v838, %v838
      %v888 = vmul.f32 %v839, %v839
      %v889 = vmul.f32 %v840, %v840
      %v890 = vmul.f32 %v841, %v841
      %v891 = vmul.f32 %v842, %v842
      %v892 = vadd.f32 %v884, %v886
      %v893 = vadd.f32 %v892, %v888
      %v894 = vadd.f32 %v893, %v890
      %v895 = vrot.slane %v894, 4
      %v896 = vadd.f32 %v894, %v895
      %v897 = vrot.slane %v896, 2
      %v898 = vadd.f32 %v896, %v897
      %v899 = vrot.slane %v898, 1
      %v900 = vadd.f32 %v898, %v899
      %v901 = vadd.f32 %v885, %v887
      %v902 = vadd.f32 %v901, %v889
      %v903 = vadd.f32 %v902, %v891
      %v904 = vrot.slane %v903, 4
      %v905 = vadd.f32 %v903, %v904
      %v906 = vrot.slane %v905, 2
      %v907 = vadd.f32 %v905, %v906
      %v908 = vrot.slane %v907, 1
      %v909 = vadd.f32 %v907, %v908
      %v912 = vcombine.low %v900, %v909
      %v914 = vunpack.c.l.s4 1966171168
      %v915 = vunpack.c.0.s8 %v914
      %v916 = vlaneseq
      %v917 = vshrl.u32 %v916, 7
      %v918 = vsub.s32 %v915, %v917
      %v919 = vrot.slane %v912, %v918
      %v921 = vunpack.c.l.s4 1966171168
      %v922 = vunpack.c.0.s8 %v921
      %v923 = vlaneseq
      %v924 = vshrl.u32 %v923, 7
      %v925 = vsub.s32 %v922, %v924
      %v926 = vrot.slane %v919, %v925
      %928 = vst.msk [vmem:[%s179] sm:$0x3] %vm882, %v926
      %p929 = scmp.lt.s32.totalorder %s15, 1
      %s930 = scalar_select %p929, %s15, 1
      %s931 = smul.addr %s930, 2
      %s932 = scalar_lea.vmem %s2, %s931
      %p933 = scmp.lt.s32.totalorder %s15, 1
      %s934 = scalar_select %p933, %s15, 1
      %s935 = smul.addr %s934, 2
      %s936 = scalar_lea.vmem %s3, %s935
      // Predicated region
      $region29: #{conv2d_transpose_bn_relu.2} parent=27 // pred_check
        %p937 = pneg %p80
      $region30: #{conv2d_transpose_bn_relu.2} parent=27 // pred_check_branch
        %939 = sbr.rel (%p937) target = $region32
      $region31: #{conv2d_transpose_bn_relu.2} parent=27 // pred_region
        _
      $region32: #{conv2d_transpose_bn_relu.2} parent=27 // pred_fallthru
        _
      // Predicated region
      $region33: #{conv2d_transpose_bn_relu.2} parent=27 // pred_check
        %p940 = pneg %p106
      $region34: #{conv2d_transpose_bn_relu.2} parent=27 // pred_check_branch
        %942 = sbr.rel (%p940) target = $region36
      $region35: #{conv2d_transpose_bn_relu.2} parent=27 // pred_region
        _
      $region36: #{conv2d_transpose_bn_relu.2} parent=27 // pred_fallthru
        _
    $region28: #{conv2d_transpose_bn_relu.2} parent=5 // pred_fallthru
      _
    %p943 = scmp.le.s32.totalorder 2, %s10
    // Predicated region
    $region37: #{conv2d_transpose_bn_relu.2} parent=5 // pred_check
      %p944 = pneg %p943
    $region38: #{conv2d_transpose_bn_relu.2} parent=5 // pred_check_branch
      %946 = sbr.rel (%p944) target = $region40
    $region39: #{conv2d_transpose_bn_relu.2} parent=5 // pred_region
      %s947 = ssub.s32 %s10, 2
      // Predicated region
      $region41: #{conv2d_transpose_bn_relu.2} parent=39 // pred_check
        %p948 = pneg %p86
      $region42: #{conv2d_transpose_bn_relu.2} parent=39 // pred_check_branch
        %950 = sbr.rel (%p948) target = $region44
      $region43: #{conv2d_transpose_bn_relu.2} parent=39 // pred_region
        %p951 = scmp.lt.s32.totalorder %s16, 1
        %s952 = scalar_select %p951, %s16, 1
        %s953 = smul.addr %s952, 2
        %s954 = scalar_lea.vmem %s2, %s953
      $region44: #{conv2d_transpose_bn_relu.2} parent=39 // pred_fallthru
        _
      // Predicated region
      $region45: #{conv2d_transpose_bn_relu.2} parent=39 // pred_check
        %p955 = pneg %p112
      $region46: #{conv2d_transpose_bn_relu.2} parent=39 // pred_check_branch
        %957 = sbr.rel (%p955) target = $region48
      $region47: #{conv2d_transpose_bn_relu.2} parent=39 // pred_region
        %p958 = scmp.lt.s32.totalorder %s16, 1
        %s959 = scalar_select %p958, %s16, 1
        %s960 = smul.addr %s959, 2
        %s961 = scalar_lea.vmem %s3, %s960
      $region48: #{conv2d_transpose_bn_relu.2} parent=39 // pred_fallthru
        _
    $region40: #{conv2d_transpose_bn_relu.2} parent=5 // pred_fallthru
      _
  $region6: #{conv2d_transpose_bn_relu.2} parent=0 // loop_footer
    %s14 = sadd.s32 1, %s10
  $region7: #{conv2d_transpose_bn_relu.2} parent=0 // loop_footer_branch
    %9 = sbr.rel target = $region3
  $region8: #{conv2d_transpose_bn_relu.2} parent=0 // loop_exit
    _

// kernel: conv2d_transpose_bn_relu.3
$region0: #{conv2d_transpose_bn_relu.3}
  #allocation0 [shape = 'u32[]', space=smem, size = 0x4, offset = 0x4, fixed_abs, tag = 'smem constant byte address 0x4 - core index']
  #allocation1 [shape = 'u32[144,128]{1,0:T(1,128)}', space=vmem, size = 0x12000, scoped, tag = 'internal scratch']
  %s0 = inlined_call_operand.vmem [shape: f32[2,35,140], index: 0, kind: input, shape index: {}]
  %s1 = inlined_call_operand.vmem [shape: f32[4,140,256], index: 1, kind: input, shape index: {}]
  %s2 = inlined_call_operand.vmem [shape: f32[1,256], index: 2, kind: input, shape index: {}]
  %s3 = inlined_call_operand.vmem [shape: f32[1,256], index: 3, kind: input, shape index: {}]
  %s4 = inlined_call_operand.vmem [shape: f32[2,32,256], index: 4, kind: output, shape index: {}]
  %s5 = sld [smem:[#allocation0]]
  $region49: #{conv2d_transpose_bn_relu.3} parent=0
    _
  %s7 = ssub.s32 1, %s5
  %s8 = scalar_select 0, %s7, %s5
  loop: start=0, step=1, limit=4
  $region2: #{conv2d_transpose_bn_relu.3} parent=0 // loop_pre_header
    _
  $region3: #{conv2d_transpose_bn_relu.3} parent=0 // loop_header
    %s10 = sphi 0, %s14
    %p11 = scmp.ge.s32.totalorder %s10, 4
    %s20 = sphi 0, %s22
    %s23 = sphi 0, %s20
    %s24 = sphi 0, %s23
    %s40 = sphi 0, %s24
    %s44 = sphi 0, %s44
    %s46 = sphi 0, %s44
    %s47 = sphi 0, %s46
    %s61 = sphi 0, %s47
    %s65 = sphi 0, %s65
    %s67 = sphi 0, %s65
    %s68 = sphi 0, %s67
    %s82 = sphi 0, %s68
    %s86 = sphi 0, %s86
    %s88 = sphi 0, %s86
    %s89 = sphi 0, %s88
    %s103 = sphi 0, %s89
    %s109 = sphi 0, %s111
    %s112 = sphi 0, %s109
    %s113 = sphi 0, %s112
    %s129 = sphi 0, %s113
  $region4: #{conv2d_transpose_bn_relu.3} parent=0 // loop_header_branch
    %13 = sbr.rel (%p11) target = $region8
  $region5: #{conv2d_transpose_bn_relu.3} parent=0 // loop_body
    %s15 = ssub.s32 %s10, 1
    %s16 = ssub.s32 %s10, 2
    %s17 = sadd.s32 %s10, 1
    %s18 = ssub.s32 %s10, %s17
    %p19 = scmp.eq.s32.totalorder %s18, 0
    %s21 = sadd.s32 %s20, 1
    %s22 = scalar_select %p19, %s20, %s21
    %p25 = pneg %p19
    %p26 = scmp.eq.s32.totalorder %s10, 1
    %p27 = por %p25, %p26
    %p28 = scmp.ne.s32.totalorder %s20, %s23
    %p29 = scmp.eq.s32.totalorder %s10, 0
    %p30 = por %p28, %p29
    %p31 = scmp.ne.s32.totalorder %s20, %s23
    %p32 = scmp.eq.s32.totalorder %s15, 1
    %p33 = por %p31, %p32
    %p34 = scmp.ne.s32.totalorder %s23, %s24
    %p35 = scmp.eq.s32.totalorder %s15, 0
    %p36 = por %p34, %p35
    %p37 = scmp.ne.s32.totalorder %s23, %s24
    %p38 = scmp.eq.s32.totalorder %s16, 1
    %p39 = por %p37, %p38
    %p41 = scmp.ne.s32.totalorder %s24, %s40
    %p42 = scmp.eq.s32.totalorder %s16, 0
    %p43 = por %p41, %p42
    %s45 = sadd.s32 %s44, 1
    %p48 = scmp.eq.s32.totalorder %s10, 1
    %p49 = scmp.ne.s32.totalorder %s44, %s46
    %p50 = scmp.eq.s32.totalorder %s10, 0
    %p51 = por %p49, %p50
    %p52 = scmp.ne.s32.totalorder %s44, %s46
    %p53 = scmp.eq.s32.totalorder %s15, 1
    %p54 = por %p52, %p53
    %p55 = scmp.ne.s32.totalorder %s46, %s47
    %p56 = scmp.eq.s32.totalorder %s15, 0
    %p57 = por %p55, %p56
    %p58 = scmp.ne.s32.totalorder %s46, %s47
    %p59 = scmp.eq.s32.totalorder %s16, 1
    %p60 = por %p58, %p59
    %p62 = scmp.ne.s32.totalorder %s47, %s61
    %p63 = scmp.eq.s32.totalorder %s16, 0
    %p64 = por %p62, %p63
    %s66 = sadd.s32 %s65, 1
    %p69 = scmp.eq.s32.totalorder %s10, 1
    %p70 = scmp.ne.s32.totalorder %s65, %s67
    %p71 = scmp.eq.s32.totalorder %s10, 0
    %p72 = por %p70, %p71
    %p73 = scmp.ne.s32.totalorder %s65, %s67
    %p74 = scmp.eq.s32.totalorder %s15, 1
    %p75 = por %p73, %p74
    %p76 = scmp.ne.s32.totalorder %s67, %s68
    %p77 = scmp.eq.s32.totalorder %s15, 0
    %p78 = por %p76, %p77
    %p79 = scmp.ne.s32.totalorder %s67, %s68
    %p80 = scmp.eq.s32.totalorder %s16, 1
    %p81 = por %p79, %p80
    %p83 = scmp.ne.s32.totalorder %s68, %s82
    %p84 = scmp.eq.s32.totalorder %s16, 0
    %p85 = por %p83, %p84
    %s87 = sadd.s32 %s86, 1
    %p90 = scmp.eq.s32.totalorder %s10, 1
    %p91 = scmp.ne.s32.totalorder %s86, %s88
    %p92 = scmp.eq.s32.totalorder %s10, 0
    %p93 = por %p91, %p92
    %p94 = scmp.ne.s32.totalorder %s86, %s88
    %p95 = scmp.eq.s32.totalorder %s15, 1
    %p96 = por %p94, %p95
    %p97 = scmp.ne.s32.totalorder %s88, %s89
    %p98 = scmp.eq.s32.totalorder %s15, 0
    %p99 = por %p97, %p98
    %p100 = scmp.ne.s32.totalorder %s88, %s89
    %p101 = scmp.eq.s32.totalorder %s16, 1
    %p102 = por %p100, %p101
    %p104 = scmp.ne.s32.totalorder %s89, %s103
    %p105 = scmp.eq.s32.totalorder %s16, 0
    %p106 = por %p104, %p105
    %s107 = ssub.s32 %s10, %s17
    %p108 = scmp.eq.s32.totalorder %s107, 0
    %s110 = sadd.s32 %s109, 1
    %s111 = scalar_select %p108, %s109, %s110
    %p114 = pneg %p108
    %p115 = scmp.eq.s32.totalorder %s10, 1
    %p116 = por %p114, %p115
    %p117 = scmp.ne.s32.totalorder %s109, %s112
    %p118 = scmp.eq.s32.totalorder %s10, 0
    %p119 = por %p117, %p118
    %p120 = scmp.ne.s32.totalorder %s109, %s112
    %p121 = scmp.eq.s32.totalorder %s15, 1
    %p122 = por %p120, %p121
    %p123 = scmp.ne.s32.totalorder %s112, %s113
    %p124 = scmp.eq.s32.totalorder %s15, 0
    %p125 = por %p123, %p124
    %p126 = scmp.ne.s32.totalorder %s112, %s113
    %p127 = scmp.eq.s32.totalorder %s16, 1
    %p128 = por %p126, %p127
    %p130 = scmp.ne.s32.totalorder %s113, %s129
    %p131 = scmp.eq.s32.totalorder %s16, 0
    %p132 = por %p130, %p131
    %p133 = scmp.le.s32.totalorder 1, %s10
    %p134 = scmp.lt.s32.totalorder %s10, 3
    %p135 = pnand %p133, %p134
    %p136 = pneg %p135
    // Predicated region
    $region9: #{conv2d_transpose_bn_relu.3} parent=5 // pred_check
      _
    $region10: #{conv2d_transpose_bn_relu.3} parent=5 // pred_check_branch
      %138 = sbr.rel (%p135) target = $region12
    $region11: #{conv2d_transpose_bn_relu.3} parent=5 // pred_region
      %s139 = ssub.s32 %s10, 1
      // Predicated region
      $region13: #{conv2d_transpose_bn_relu.3} parent=11 // pred_check
        %p140 = pneg %p57
      $region14: #{conv2d_transpose_bn_relu.3} parent=11 // pred_check_branch
        %142 = sbr.rel (%p140) target = $region16
      $region15: #{conv2d_transpose_bn_relu.3} parent=11 // pred_region
        _
      $region16: #{conv2d_transpose_bn_relu.3} parent=11 // pred_fallthru
        _
      // Predicated region
      $region17: #{conv2d_transpose_bn_relu.3} parent=11 // pred_check
        %p143 = pneg %p78
      $region18: #{conv2d_transpose_bn_relu.3} parent=11 // pred_check_branch
        %145 = sbr.rel (%p143) target = $region20
      $region19: #{conv2d_transpose_bn_relu.3} parent=11 // pred_region
        _
      $region20: #{conv2d_transpose_bn_relu.3} parent=11 // pred_fallthru
        _
      // Predicated region
      $region21: #{conv2d_transpose_bn_relu.3} parent=11 // pred_check
        %p146 = pneg %p99
      $region22: #{conv2d_transpose_bn_relu.3} parent=11 // pred_check_branch
        %148 = sbr.rel (%p146) target = $region24
      $region23: #{conv2d_transpose_bn_relu.3} parent=11 // pred_region
        _
      $region24: #{conv2d_transpose_bn_relu.3} parent=11 // pred_fallthru
        _
    $region12: #{conv2d_transpose_bn_relu.3} parent=5 // pred_fallthru
      _
    %p149 = scmp.lt.s32.totalorder %s10, 2
    // Predicated region
    $region25: #{conv2d_transpose_bn_relu.3} parent=5 // pred_check
      %p150 = pneg %p149
    $region26: #{conv2d_transpose_bn_relu.3} parent=5 // pred_check_branch
      %152 = sbr.rel (%p150) target = $region28
    $region27: #{conv2d_transpose_bn_relu.3} parent=5 // pred_region
      // Predicated region
      $region29: #{conv2d_transpose_bn_relu.3} parent=27 // pred_check
        %p153 = pneg %p30
      $region30: #{conv2d_transpose_bn_relu.3} parent=27 // pred_check_branch
        %155 = sbr.rel (%p153) target = $region32
      $region31: #{conv2d_transpose_bn_relu.3} parent=27 // pred_region
        %p156 = scmp.lt.s32.totalorder %s10, 1
        %s157 = scalar_select %p156, %s10, 1
        %s158 = smul.addr %s157, 10
        %s159 = smul.addr %s158, 8
        %s160 = scalar_lea.vmem %s0, %s159
      $region32: #{conv2d_transpose_bn_relu.3} parent=27 // pred_fallthru
        _
    $region28: #{conv2d_transpose_bn_relu.3} parent=5 // pred_fallthru
      _
    %p161 = scmp.le.s32.totalorder 1, %s10
    %p162 = scmp.lt.s32.totalorder %s10, 3
    %p163 = pnand %p161, %p162
    %p164 = pneg %p163
    // Predicated region
    $region33: #{conv2d_transpose_bn_relu.3} parent=5 // pred_check
      _
    $region34: #{conv2d_transpose_bn_relu.3} parent=5 // pred_check_branch
      %166 = sbr.rel (%p163) target = $region36
    $region35: #{conv2d_transpose_bn_relu.3} parent=5 // pred_region
      %s167 = ssub.s32 %s10, 1
      %p168 = scmp.lt.s32.totalorder %s15, 1
      %s169 = scalar_select %p168, %s15, 1
      %s170 = smul.addr %s169, 10
      %s171 = smul.addr %s170, 8
      %s172 = scalar_lea.vmem %s0, %s171
      %p173 = pneg %p36
      %p174 = pneg %p33
      %p175 = pneg %p57
      %p176 = pneg %p54
      %p177 = pneg %p78
      %p178 = pneg %p75
      %p179 = pneg %p99
      %p180 = pneg %p96
      %p181 = pneg %p125
      %p182 = pneg %p122
      %p183 = scmp.lt.s32.totalorder %s15, 1
      %s184 = scalar_select %p183, %s15, 1
      %s185 = smul.addr %s184, 8
      %s186 = smul.addr %s185, 8
      %s187 = scalar_lea.vmem %s4, %s186
      %p188 = scmp.lt.s32.totalorder %s15, 1
      %s189 = scalar_select %p188, %s15, 1
      %s190 = smul.addr %s189, 10
      %s191 = smul.addr %s190, 8
      %s192 = scalar_lea.vmem %s0, %s191
      %p193 = scmp.lt.s32.totalorder %s15, 1
      %s194 = scalar_select %p193, %s15, 1
      %s195 = smul.addr %s194, 8
      %s196 = smul.addr %s195, 8
      %s197 = scalar_lea.vmem %s4, %s196
      %v198 = vld [vmem:[%s192] sm:$0xff]
      %v199 = vld [vmem:[%s192 + $0x8] sm:$0xff]
      %v200 = vld [vmem:[%s192 + $0x10] sm:$0xff]
      %v201 = vld [vmem:[%s192 + $0x18] sm:$0xff]
      %v202 = vld [vmem:[%s192 + $0x20] sm:$0xff]
      %v203 = vld [vmem:[%s192 + $0x28] sm:$0xff]
      %v204 = vld [vmem:[%s192 + $0x30] sm:$0xff]
      %v205 = vld [vmem:[%s192 + $0x38] sm:$0xff]
      %v206 = vld [vmem:[%s192 + $0x40] sm:$0x7]
      %v207 = vld [vmem:[%s192 + $0x48] sm:$0x7]
      %v208 = vld [vmem:[%s1] sm:$0xff]
      %v209 = vld [vmem:[%s1 + $0x8] sm:$0xff]
      %v210 = vld [vmem:[%s1 + $0x10] sm:$0xff]
      %v211 = vld [vmem:[%s1 + $0x18] sm:$0xff]
      %v212 = vld [vmem:[%s1 + $0x20] sm:$0xff]
      %v213 = vld [vmem:[%s1 + $0x28] sm:$0xff]
      %v214 = vld [vmem:[%s1 + $0x30] sm:$0xff]
      %v215 = vld [vmem:[%s1 + $0x38] sm:$0xff]
      %v216 = vld [vmem:[%s1 + $0x40] sm:$0xff]
      %v217 = vld [vmem:[%s1 + $0x48] sm:$0xff]
      %v218 = vld [vmem:[%s1 + $0x50] sm:$0xff]
      %v219 = vld [vmem:[%s1 + $0x58] sm:$0xff]
      %v220 = vld [vmem:[%s1 + $0x60] sm:$0xff]
      %v221 = vld [vmem:[%s1 + $0x68] sm:$0xff]
      %v222 = vld [vmem:[%s1 + $0x70] sm:$0xff]
      %v223 = vld [vmem:[%s1 + $0x78] sm:$0xff]
      %v224 = vld [vmem:[%s1 + $0x80] sm:$0xff]
      %v225 = vld [vmem:[%s1 + $0x88] sm:$0xff]
      %v226 = vld [vmem:[%s1 + $0x90] sm:$0xff]
      %v227 = vld [vmem:[%s1 + $0x98] sm:$0xff]
      %v228 = vld [vmem:[%s1 + $0xa0] sm:$0xff]
      %v229 = vld [vmem:[%s1 + $0xa8] sm:$0xff]
      %v230 = vld [vmem:[%s1 + $0xb0] sm:$0xff]
      %v231 = vld [vmem:[%s1 + $0xb8] sm:$0xff]
      %v232 = vld [vmem:[%s1 + $0xc0] sm:$0xff]
      %v233 = vld [vmem:[%s1 + $0xc8] sm:$0xff]
      %v234 = vld [vmem:[%s1 + $0xd0] sm:$0xff]
      %v235 = vld [vmem:[%s1 + $0xd8] sm:$0xff]
      %v236 = vld [vmem:[%s1 + $0xe0] sm:$0xff]
      %v237 = vld [vmem:[%s1 + $0xe8] sm:$0xff]
      %v238 = vld [vmem:[%s1 + $0xf0] sm:$0xff]
      %v239 = vld [vmem:[%s1 + $0xf8] sm:$0xff]
      %v240 = vld [vmem:[%s1 + $0x100] sm:$0xff]
      %v241 = vld [vmem:[%s1 + $0x108] sm:$0xff]
      %v242 = vld [vmem:[%s1 + $0x110] sm:$0xf]
      %v243 = vld [vmem:[%s1 + $0x118] sm:$0xf]
      %v244 = vld [vmem:[%s1 + $0x120] sm:$0xff]
      %v245 = vld [vmem:[%s1 + $0x128] sm:$0xff]
      %v246 = vld [vmem:[%s1 + $0x130] sm:$0xff]
      %v247 = vld [vmem:[%s1 + $0x138] sm:$0xff]
      %v248 = vld [vmem:[%s1 + $0x140] sm:$0xff]
      %v249 = vld [vmem:[%s1 + $0x148] sm:$0xff]
      %v250 = vld [vmem:[%s1 + $0x150] sm:$0xff]
      %v251 = vld [vmem:[%s1 + $0x158] sm:$0xff]
      %v252 = vld [vmem:[%s1 + $0x160] sm:$0xff]
      %v253 = vld [vmem:[%s1 + $0x168] sm:$0xff]
      %v254 = vld [vmem:[%s1 + $0x170] sm:$0xff]
      %v255 = vld [vmem:[%s1 + $0x178] sm:$0xff]
      %v256 = vld [vmem:[%s1 + $0x180] sm:$0xff]
      %v257 = vld [vmem:[%s1 + $0x188] sm:$0xff]
      %v258 = vld [vmem:[%s1 + $0x190] sm:$0xff]
      %v259 = vld [vmem:[%s1 + $0x198] sm:$0xff]
      %v260 = vld [vmem:[%s1 + $0x1a0] sm:$0xff]
      %v261 = vld [vmem:[%s1 + $0x1a8] sm:$0xff]
      %v262 = vld [vmem:[%s1 + $0x1b0] sm:$0xff]
      %v263 = vld [vmem:[%s1 + $0x1b8] sm:$0xff]
      %v264 = vld [vmem:[%s1 + $0x1c0] sm:$0xff]
      %v265 = vld [vmem:[%s1 + $0x1c8] sm:$0xff]
      %v266 = vld [vmem:[%s1 + $0x1d0] sm:$0xff]
      %v267 = vld [vmem:[%s1 + $0x1d8] sm:$0xff]
      %v268 = vld [vmem:[%s1 + $0x1e0] sm:$0xff]
      %v269 = vld [vmem:[%s1 + $0x1e8] sm:$0xff]
      %v270 = vld [vmem:[%s1 + $0x1f0] sm:$0xff]
      %v271 = vld [vmem:[%s1 + $0x1f8] sm:$0xff]
      %v272 = vld [vmem:[%s1 + $0x200] sm:$0xff]
      %v273 = vld [vmem:[%s1 + $0x208] sm:$0xff]
      %v274 = vld [vmem:[%s1 + $0x210] sm:$0xff]
      %v275 = vld [vmem:[%s1 + $0x218] sm:$0xff]
      %v276 = vld [vmem:[%s1 + $0x220] sm:$0xff]
      %v277 = vld [vmem:[%s1 + $0x228] sm:$0xff]
      %v278 = vld [vmem:[%s1 + $0x230] sm:$0xf]
      %v279 = vld [vmem:[%s1 + $0x238] sm:$0xf]
      %v280 = vld [vmem:[%s1 + $0x240] sm:$0xff]
      %v281 = vld [vmem:[%s1 + $0x248] sm:$0xff]
      %v282 = vld [vmem:[%s1 + $0x250] sm:$0xff]
      %v283 = vld [vmem:[%s1 + $0x258] sm:$0xff]
      %v284 = vld [vmem:[%s1 + $0x260] sm:$0xff]
      %v285 = vld [vmem:[%s1 + $0x268] sm:$0xff]
      %v286 = vld [vmem:[%s1 + $0x270] sm:$0xff]
      %v287 = vld [vmem:[%s1 + $0x278] sm:$0xff]
      %v288 = vld [vmem:[%s1 + $0x280] sm:$0xff]
      %v289 = vld [vmem:[%s1 + $0x288] sm:$0xff]
      %v290 = vld [vmem:[%s1 + $0x290] sm:$0xff]
      %v291 = vld [vmem:[%s1 + $0x298] sm:$0xff]
      %v292 = vld [vmem:[%s1 + $0x2a0] sm:$0xff]
      %v293 = vld [vmem:[%s1 + $0x2a8] sm:$0xff]
      %v294 = vld [vmem:[%s1 + $0x2b0] sm:$0xff]
      %v295 = vld [vmem:[%s1 + $0x2b8] sm:$0xff]
      %v296 = vld [vmem:[%s1 + $0x2c0] sm:$0xff]
      %v297 = vld [vmem:[%s1 + $0x2c8] sm:$0xff]
      %v298 = vld [vmem:[%s1 + $0x2d0] sm:$0xff]
      %v299 = vld [vmem:[%s1 + $0x2d8] sm:$0xff]
      %v300 = vld [vmem:[%s1 + $0x2e0] sm:$0xff]
      %v301 = vld [vmem:[%s1 + $0x2e8] sm:$0xff]
      %v302 = vld [vmem:[%s1 + $0x2f0] sm:$0xff]
      %v303 = vld [vmem:[%s1 + $0x2f8] sm:$0xff]
      %v304 = vld [vmem:[%s1 + $0x300] sm:$0xff]
      %v305 = vld [vmem:[%s1 + $0x308] sm:$0xff]
      %v306 = vld [vmem:[%s1 + $0x310] sm:$0xff]
      %v307 = vld [vmem:[%s1 + $0x318] sm:$0xff]
      %v308 = vld [vmem:[%s1 + $0x320] sm:$0xff]
      %v309 = vld [vmem:[%s1 + $0x328] sm:$0xff]
      %v310 = vld [vmem:[%s1 + $0x330] sm:$0xff]
      %v311 = vld [vmem:[%s1 + $0x338] sm:$0xff]
      %v312 = vld [vmem:[%s1 + $0x340] sm:$0xff]
      %v313 = vld [vmem:[%s1 + $0x348] sm:$0xff]
      %v314 = vld [vmem:[%s1 + $0x350] sm:$0xf]
      %v315 = vld [vmem:[%s1 + $0x358] sm:$0xf]
      %v316 = vld [vmem:[%s1 + $0x360] sm:$0xff]
      %v317 = vld [vmem:[%s1 + $0x368] sm:$0xff]
      %v318 = vld [vmem:[%s1 + $0x370] sm:$0xff]
      %v319 = vld [vmem:[%s1 + $0x378] sm:$0xff]
      %v320 = vld [vmem:[%s1 + $0x380] sm:$0xff]
      %v321 = vld [vmem:[%s1 + $0x388] sm:$0xff]
      %v322 = vld [vmem:[%s1 + $0x390] sm:$0xff]
      %v323 = vld [vmem:[%s1 + $0x398] sm:$0xff]
      %v324 = vld [vmem:[%s1 + $0x3a0] sm:$0xff]
      %v325 = vld [vmem:[%s1 + $0x3a8] sm:$0xff]
      %v326 = vld [vmem:[%s1 + $0x3b0] sm:$0xff]
      %v327 = vld [vmem:[%s1 + $0x3b8] sm:$0xff]
      %v328 = vld [vmem:[%s1 + $0x3c0] sm:$0xff]
      %v329 = vld [vmem:[%s1 + $0x3c8] sm:$0xff]
      %v330 = vld [vmem:[%s1 + $0x3d0] sm:$0xff]
      %v331 = vld [vmem:[%s1 + $0x3d8] sm:$0xff]
      %v332 = vld [vmem:[%s1 + $0x3e0] sm:$0xff]
      %v333 = vld [vmem:[%s1 + $0x3e8] sm:$0xff]
      %v334 = vld [vmem:[%s1 + $0x3f0] sm:$0xff]
      %v335 = vld [vmem:[%s1 + $0x3f8] sm:$0xff]
      %v336 = vld [vmem:[%s1 + $0x400] sm:$0xff]
      %v337 = vld [vmem:[%s1 + $0x408] sm:$0xff]
      %v338 = vld [vmem:[%s1 + $0x410] sm:$0xff]
      %v339 = vld [vmem:[%s1 + $0x418] sm:$0xff]
      %v340 = vld [vmem:[%s1 + $0x420] sm:$0xff]
      %v341 = vld [vmem:[%s1 + $0x428] sm:$0xff]
      %v342 = vld [vmem:[%s1 + $0x430] sm:$0xff]
      %v343 = vld [vmem:[%s1 + $0x438] sm:$0xff]
      %v344 = vld [vmem:[%s1 + $0x440] sm:$0xff]
      %v345 = vld [vmem:[%s1 + $0x448] sm:$0xff]
      %v346 = vld [vmem:[%s1 + $0x450] sm:$0xff]
      %v347 = vld [vmem:[%s1 + $0x458] sm:$0xff]
      %v348 = vld [vmem:[%s1 + $0x460] sm:$0xff]
      %v349 = vld [vmem:[%s1 + $0x468] sm:$0xff]
      %v350 = vld [vmem:[%s1 + $0x470] sm:$0xf]
      %v351 = vld [vmem:[%s1 + $0x478] sm:$0xf]
      %vm362 = vcmask 1046528
      %v363 = vrot.slane %v198, 1
      %v364 = vrot.slane %v200, 1
      %v365 = vsel %vm362, %v363, %v364
      %v366 = vrot.slane %v199, 1
      %v367 = vrot.slane %v201, 1
      %v368 = vsel %vm362, %v366, %v367
      %v369 = vrot.slane %v202, 1
      %v370 = vsel %vm362, %v364, %v369
      %v371 = vrot.slane %v203, 1
      %v372 = vsel %vm362, %v367, %v371
      %v373 = vrot.slane %v204, 1
      %v374 = vsel %vm362, %v369, %v373
      %v375 = vrot.slane %v205, 1
      %v376 = vsel %vm362, %v371, %v375
      %v377 = vrot.slane %v206, 1
      %v378 = vsel %vm362, %v373, %v377
      %v379 = vrot.slane %v207, 1
      %v380 = vsel %vm362, %v375, %v379
      %vm385 = vcmask 97280
      %v386 = vsel %vm385, %v368, 0
      %v388 = vsel %vm385, %v372, 0
      %v390 = vsel %vm385, %v376, 0
      %v392 = vsel %vm385, %v380, 0
      %vm394 = vcmask 1043456
      %v396 = vsel %vm394, %v278, 0
      %v399 = vsel %vm394, %v279, 0
      %401 = vmatprep.subr.mxu0 %v245
      %402 = vmatpush1.msra.mxu0 %v244
      %403 = vmatprep.subr.mxu0 %v247
      %404 = vmatpush1.msra.mxu0 %v246
      %405 = vmatprep.subr.mxu0 %v249
      %406 = vmatpush1.msra.mxu0 %v248
      %407 = vmatprep.subr.mxu0 %v251
      %408 = vmatpush1.msra.mxu0 %v250
      %409 = vmatprep.subr.mxu0 %v253
      %410 = vmatpush1.msra.mxu0 %v252
      %411 = vmatprep.subr.mxu0 %v255
      %412 = vmatpush1.msra.mxu0 %v254
      %413 = vmatprep.subr.mxu0 %v257
      %414 = vmatpush1.msra.mxu0 %v256
      %415 = vmatprep.subr.mxu0 %v259
      %416 = vmatpush1.msra.mxu0 %v258
      %417 = vmatprep.subr.mxu0 %v261
      %418 = vmatpush1.msra.mxu0 %v260
      %419 = vmatprep.subr.mxu0 %v263
      %420 = vmatpush1.msra.mxu0 %v262
      %421 = vmatprep.subr.mxu0 %v265
      %422 = vmatpush1.msra.mxu0 %v264
      %423 = vmatprep.subr.mxu0 %v267
      %424 = vmatpush1.msra.mxu0 %v266
      %425 = vmatprep.subr.mxu0 %v269
      %426 = vmatpush1.msra.mxu0 %v268
      %427 = vmatprep.subr.mxu0 %v271
      %428 = vmatpush1.msra.mxu0 %v270
      %429 = vmatprep.subr.mxu0 %v273
      %430 = vmatpush1.msra.mxu0 %v272
      %431 = vmatprep.subr.mxu0 %v275
      %432 = vmatpush1.msra.mxu0 %v274
      %433 = vmatprep.subr.mxu0 %v277
      %434 = vmatpush1.msra.mxu0 %v276
      %435 = vmatprep.subr.mxu0 %v399
      %436 = vmatpush1.msra.mxu0 %v396
      %437 = vmatprep.subr.mxu0 0.0
      %438 = vmatpush1.msra.mxu0 0.0
      %439 = vmatprep.subr.mxu0 0.0
      %440 = vmatpush1.msra.mxu0 0.0
      %441 = vmatprep.subr.mxu0 0.0
      %442 = vmatpush1.msra.mxu0 0.0
      %443 = vmatprep.subr.mxu0 0.0
      %444 = vmatpush1.msra.mxu0 0.0
      %445 = vmatprep.subr.mxu0 0.0
      %446 = vmatpush1.msra.mxu0 0.0
      %447 = vmatprep.subr.mxu0 0.0
      %448 = vmatpush1.msra.mxu0 0.0
      %449 = vmatprep.subr.mxu0 0.0
      %450 = vmatpush1.msra.mxu0 0.0
      %451 = vmatprep.subr.mxu0 0.0
      %452 = vmatpush1.msra.mxu0 0.0
      %453 = vmatprep.subr.mxu0 0.0
      %454 = vmatpush1.msra.mxu0 0.0
      %455 = vmatprep.subr.mxu0 0.0
      %456 = vmatpush1.msra.mxu0 0.0
      %457 = vmatprep.subr.mxu0 0.0
      %458 = vmatpush1.msra.mxu0 0.0
      %459 = vmatprep.subr.mxu0 0.0
      %460 = vmatpush1.msra.mxu0 0.0
      %461 = vmatprep.subr.mxu0 0.0
      %462 = vmatpush1.msra.mxu0 0.0
      %463 = vmatprep.subr.mxu0 0.0
      %464 = vmatpush1.msra.mxu0 0.0
      %465 = vmatprep.mubr.f32.mxu0 %v386
      %466 = vmatmul.mubr.f32.gmra.mrb[0].mxu0 %v365
      %v467 = vpop.f32.mrb[0].mxu0
      %v468 = vadd.f32 0.0, %v467
      %v469 = vpop.f32.mrb[0].mxu0
      %v470 = vadd.f32 0.0, %v469
      %471 = vmatprep.mubr.f32.mxu0 %v388
      %472 = vmatmul.mubr.f32.gmra.mrb[0].mxu0 %v370
      %v473 = vpop.f32.mrb[0].mxu0
      %v474 = vadd.f32 0.0, %v473
      %v475 = vpop.f32.mrb[0].mxu0
      %v476 = vadd.f32 0.0, %v475
      %477 = vmatprep.mubr.f32.mxu0 %v390
      %478 = vmatmul.mubr.f32.gmra.mrb[0].mxu0 %v374
      %v479 = vpop.f32.mrb[0].mxu0
      %v480 = vadd.f32 0.0, %v479
      %v481 = vpop.f32.mrb[0].mxu0
      %v482 = vadd.f32 0.0, %v481
      %483 = vmatprep.mubr.f32.mxu0 %v392
      %484 = vmatmul.mubr.f32.gmra.mrb[0].mxu0 %v378
      %v485 = vpop.f32.mrb[0].mxu0
      %v486 = vadd.f32 0.0, %v485
      %v487 = vpop.f32.mrb[0].mxu0
      %v488 = vadd.f32 0.0, %v487
      %489 = vdwg.mxu0
      %v490 = vsel %vm385, %v199, 0
      %v492 = vsel %vm385, %v201, 0
      %v494 = vsel %vm385, %v203, 0
      %v496 = vsel %vm385, %v205, 0
      %v499 = vsel %vm394, %v242, 0
      %v502 = vsel %vm394, %v243, 0
      %504 = vmatprep.subr.mxu0 %v209
      %505 = vmatpush1.msra.mxu0 %v208
      %506 = vmatprep.subr.mxu0 %v211
      %507 = vmatpush1.msra.mxu0 %v210
      %508 = vmatprep.subr.mxu0 %v213
      %509 = vmatpush1.msra.mxu0 %v212
      %510 = vmatprep.subr.mxu0 %v215
      %511 = vmatpush1.msra.mxu0 %v214
      %512 = vmatprep.subr.mxu0 %v217
      %513 = vmatpush1.msra.mxu0 %v216
      %514 = vmatprep.subr.mxu0 %v219
      %515 = vmatpush1.msra.mxu0 %v218
      %516 = vmatprep.subr.mxu0 %v221
      %517 = vmatpush1.msra.mxu0 %v220
      %518 = vmatprep.subr.mxu0 %v223
      %519 = vmatpush1.msra.mxu0 %v222
      %520 = vmatprep.subr.mxu0 %v225
      %521 = vmatpush1.msra.mxu0 %v224
      %522 = vmatprep.subr.mxu0 %v227
      %523 = vmatpush1.msra.mxu0 %v226
      %524 = vmatprep.subr.mxu0 %v229
      %525 = vmatpush1.msra.mxu0 %v228
      %526 = vmatprep.subr.mxu0 %v231
      %527 = vmatpush1.msra.mxu0 %v230
      %528 = vmatprep.subr.mxu0 %v233
      %529 = vmatpush1.msra.mxu0 %v232
      %530 = vmatprep.subr.mxu0 %v235
      %531 = vmatpush1.msra.mxu0 %v234
      %532 = vmatprep.subr.mxu0 %v237
      %533 = vmatpush1.msra.mxu0 %v236
      %534 = vmatprep.subr.mxu0 %v239
      %535 = vmatpush1.msra.mxu0 %v238
      %536 = vmatprep.subr.mxu0 %v241
      %537 = vmatpush1.msra.mxu0 %v240
      %538 = vmatprep.subr.mxu0 %v502
      %539 = vmatpush1.msra.mxu0 %v499
      %540 = vmatprep.subr.mxu0 0.0
      %541 = vmatpush1.msra.mxu0 0.0
      %542 = vmatprep.subr.mxu0 0.0
      %543 = vmatpush1.msra.mxu0 0.0
      %544 = vmatprep.subr.mxu0 0.0
      %545 = vmatpush1.msra.mxu0 0.0
      %546 = vmatprep.subr.mxu0 0.0
      %547 = vmatpush1.msra.mxu0 0.0
      %548 = vmatprep.subr.mxu0 0.0
      %549 = vmatpush1.msra.mxu0 0.0
      %550 = vmatprep.subr.mxu0 0.0
      %551 = vmatpush1.msra.mxu0 0.0
      %552 = vmatprep.subr.mxu0 0.0
      %553 = vmatpush1.msra.mxu0 0.0
      %554 = vmatprep.subr.mxu0 0.0
      %555 = vmatpush1.msra.mxu0 0.0
      %556 = vmatprep.subr.mxu0 0.0
      %557 = vmatpush1.msra.mxu0 0.0
      %558 = vmatprep.subr.mxu0 0.0
      %559 = vmatpush1.msra.mxu0 0.0
      %560 = vmatprep.subr.mxu0 0.0
      %561 = vmatpush1.msra.mxu0 0.0
      %562 = vmatprep.subr.mxu0 0.0
      %563 = vmatpush1.msra.mxu0 0.0
      %564 = vmatprep.subr.mxu0 0.0
      %565 = vmatpush1.msra.mxu0 0.0
      %566 = vmatprep.subr.mxu0 0.0
      %567 = vmatpush1.msra.mxu0 0.0
      %568 = vmatprep.mubr.f32.mxu0 %v490
      %569 = vmatmul.mubr.f32.gmra.mrb[0].mxu0 %v198
      %v570 = vpop.f32.mrb[0].mxu0
      %v571 = vadd.f32 %v468, %v570
      %v572 = vpop.f32.mrb[0].mxu0
      %v573 = vadd.f32 %v470, %v572
      %574 = vmatprep.mubr.f32.mxu0 %v492
      %575 = vmatmul.mubr.f32.gmra.mrb[0].mxu0 %v200
      %v576 = vpop.f32.mrb[0].mxu0
      %v577 = vadd.f32 %v474, %v576
      %v578 = vpop.f32.mrb[0].mxu0
      %v579 = vadd.f32 %v476, %v578
      %580 = vmatprep.mubr.f32.mxu0 %v494
      %581 = vmatmul.mubr.f32.gmra.mrb[0].mxu0 %v202
      %v582 = vpop.f32.mrb[0].mxu0
      %v583 = vadd.f32 %v480, %v582
      %v584 = vpop.f32.mrb[0].mxu0
      %v585 = vadd.f32 %v482, %v584
      %586 = vmatprep.mubr.f32.mxu0 %v496
      %587 = vmatmul.mubr.f32.gmra.mrb[0].mxu0 %v204
      %v588 = vpop.f32.mrb[0].mxu0
      %v589 = vadd.f32 %v486, %v588
      %v590 = vpop.f32.mrb[0].mxu0
      %v591 = vadd.f32 %v488, %v590
      %592 = vdwg.mxu0
      %vm593 = vcmask 1045504
      %v594 = vrot.slane %v198, 2
      %v595 = vrot.slane %v200, 2
      %v596 = vsel %vm593, %v594, %v595
      %v597 = vrot.slane %v199, 2
      %v598 = vrot.slane %v201, 2
      %v599 = vsel %vm593, %v597, %v598
      %v600 = vrot.slane %v202, 2
      %v601 = vsel %vm593, %v595, %v600
      %v602 = vrot.slane %v203, 2
      %v603 = vsel %vm593, %v598, %v602
      %v604 = vrot.slane %v204, 2
      %v605 = vsel %vm593, %v600, %v604
      %v606 = vrot.slane %v205, 2
      %v607 = vsel %vm593, %v602, %v606
      %v608 = vrot.slane %v206, 2
      %v609 = vsel %vm593, %v604, %v608
      %v610 = vrot.slane %v207, 2
      %v611 = vsel %vm593, %v606, %v610
      %v616 = vsel %vm385, %v599, 0
      %v618 = vsel %vm385, %v603, 0
      %v620 = vsel %vm385, %v607, 0
      %v622 = vsel %vm385, %v611, 0
      %v625 = vsel %vm394, %v314, 0
      %v628 = vsel %vm394, %v315, 0
      %630 = vmatprep.subr.mxu0 %v281
      %631 = vmatpush1.msra.mxu0 %v280
      %632 = vmatprep.subr.mxu0 %v283
      %633 = vmatpush1.msra.mxu0 %v282
      %634 = vmatprep.subr.mxu0 %v285
      %635 = vmatpush1.msra.mxu0 %v284
      %636 = vmatprep.subr.mxu0 %v287
      %637 = vmatpush1.msra.mxu0 %v286
      %638 = vmatprep.subr.mxu0 %v289
      %639 = vmatpush1.msra.mxu0 %v288
      %640 = vmatprep.subr.mxu0 %v291
      %641 = vmatpush1.msra.mxu0 %v290
      %642 = vmatprep.subr.mxu0 %v293
      %643 = vmatpush1.msra.mxu0 %v292
      %644 = vmatprep.subr.mxu0 %v295
      %645 = vmatpush1.msra.mxu0 %v294
      %646 = vmatprep.subr.mxu0 %v297
      %647 = vmatpush1.msra.mxu0 %v296
      %648 = vmatprep.subr.mxu0 %v299
      %649 = vmatpush1.msra.mxu0 %v298
      %650 = vmatprep.subr.mxu0 %v301
      %651 = vmatpush1.msra.mxu0 %v300
      %652 = vmatprep.subr.mxu0 %v303
      %653 = vmatpush1.msra.mxu0 %v302
      %654 = vmatprep.subr.mxu0 %v305
      %655 = vmatpush1.msra.mxu0 %v304
      %656 = vmatprep.subr.mxu0 %v307
      %657 = vmatpush1.msra.mxu0 %v306
      %658 = vmatprep.subr.mxu0 %v309
      %659 = vmatpush1.msra.mxu0 %v308
      %660 = vmatprep.subr.mxu0 %v311
      %661 = vmatpush1.msra.mxu0 %v310
      %662 = vmatprep.subr.mxu0 %v313
      %663 = vmatpush1.msra.mxu0 %v312
      %664 = vmatprep.subr.mxu0 %v628
      %665 = vmatpush1.msra.mxu0 %v625
      %666 = vmatprep.subr.mxu0 0.0
      %667 = vmatpush1.msra.mxu0 0.0
      %668 = vmatprep.subr.mxu0 0.0
      %669 = vmatpush1.msra.mxu0 0.0
      %670 = vmatprep.subr.mxu0 0.0
      %671 = vmatpush1.msra.mxu0 0.0
      %672 = vmatprep.subr.mxu0 0.0
      %673 = vmatpush1.msra.mxu0 0.0
      %674 = vmatprep.subr.mxu0 0.0
      %675 = vmatpush1.msra.mxu0 0.0
      %676 = vmatprep.subr.mxu0 0.0
      %677 = vmatpush1.msra.mxu0 0.0
      %678 = vmatprep.subr.mxu0 0.0
      %679 = vmatpush1.msra.mxu0 0.0
      %680 = vmatprep.subr.mxu0 0.0
      %681 = vmatpush1.msra.mxu0 0.0
      %682 = vmatprep.subr.mxu0 0.0
      %683 = vmatpush1.msra.mxu0 0.0
      %684 = vmatprep.subr.mxu0 0.0
      %685 = vmatpush1.msra.mxu0 0.0
      %686 = vmatprep.subr.mxu0 0.0
      %687 = vmatpush1.msra.mxu0 0.0
      %688 = vmatprep.subr.mxu0 0.0
      %689 = vmatpush1.msra.mxu0 0.0
      %690 = vmatprep.subr.mxu0 0.0
      %691 = vmatpush1.msra.mxu0 0.0
      %692 = vmatprep.subr.mxu0 0.0
      %693 = vmatpush1.msra.mxu0 0.0
      %694 = vmatprep.mubr.f32.mxu0 %v616
      %695 = vmatmul.mubr.f32.gmra.mrb[0].mxu0 %v596
      %v696 = vpop.f32.mrb[0].mxu0
      %v697 = vadd.f32 0.0, %v696
      %v698 = vpop.f32.mrb[0].mxu0
      %v699 = vadd.f32 0.0, %v698
      %700 = vmatprep.mubr.f32.mxu0 %v618
      %701 = vmatmul.mubr.f32.gmra.mrb[0].mxu0 %v601
      %v702 = vpop.f32.mrb[0].mxu0
      %v703 = vadd.f32 0.0, %v702
      %v704 = vpop.f32.mrb[0].mxu0
      %v705 = vadd.f32 0.0, %v704
      %706 = vmatprep.mubr.f32.mxu0 %v620
      %707 = vmatmul.mubr.f32.gmra.mrb[0].mxu0 %v605
      %v708 = vpop.f32.mrb[0].mxu0
      %v709 = vadd.f32 0.0, %v708
      %v710 = vpop.f32.mrb[0].mxu0
      %v711 = vadd.f32 0.0, %v710
      %712 = vmatprep.mubr.f32.mxu0 %v622
      %713 = vmatmul.mubr.f32.gmra.mrb[0].mxu0 %v609
      %v714 = vpop.f32.mrb[0].mxu0
      %v715 = vadd.f32 0.0, %v714
      %v716 = vpop.f32.mrb[0].mxu0
      %v717 = vadd.f32 0.0, %v716
      %718 = vdwg.mxu0
      %v719 = vadd.f32 %v571, %v697
      %v720 = vadd.f32 %v573, %v699
      %v721 = vadd.f32 %v577, %v703
      %v722 = vadd.f32 %v579, %v705
      %v723 = vadd.f32 %v583, %v709
      %v724 = vadd.f32 %v585, %v711
      %v725 = vadd.f32 %v589, %v715
      %v726 = vadd.f32 %v591, %v717
      %vm727 = vcmask 1044480
      %v728 = vrot.slane %v198, 3
      %v729 = vrot.slane %v200, 3
      %v730 = vsel %vm727, %v728, %v729
      %v731 = vrot.slane %v199, 3
      %v732 = vrot.slane %v201, 3
      %v733 = vsel %vm727, %v731, %v732
      %v734 = vrot.slane %v202, 3
      %v735 = vsel %vm727, %v729, %v734
      %v736 = vrot.slane %v203, 3
      %v737 = vsel %vm727, %v732, %v736
      %v738 = vrot.slane %v204, 3
      %v739 = vsel %vm727, %v734, %v738
      %v740 = vrot.slane %v205, 3
      %v741 = vsel %vm727, %v736, %v740
      %v742 = vrot.slane %v206, 3
      %v743 = vsel %vm727, %v738, %v742
      %v744 = vrot.slane %v207, 3
      %v745 = vsel %vm727, %v740, %v744
      %v750 = vsel %vm385, %v733, 0
      %v752 = vsel %vm385, %v737, 0
      %v754 = vsel %vm385, %v741, 0
      %v756 = vsel %vm385, %v745, 0
      %v759 = vsel %vm394, %v350, 0
      %v762 = vsel %vm394, %v351, 0
      %764 = vmatprep.subr.mxu0 %v317
      %765 = vmatpush1.msra.mxu0 %v316
      %766 = vmatprep.subr.mxu0 %v319
      %767 = vmatpush1.msra.mxu0 %v318
      %768 = vmatprep.subr.mxu0 %v321
      %769 = vmatpush1.msra.mxu0 %v320
      %770 = vmatprep.subr.mxu0 %v323
      %771 = vmatpush1.msra.mxu0 %v322
      %772 = vmatprep.subr.mxu0 %v325
      %773 = vmatpush1.msra.mxu0 %v324
      %774 = vmatprep.subr.mxu0 %v327
      %775 = vmatpush1.msra.mxu0 %v326
      %776 = vmatprep.subr.mxu0 %v329
      %777 = vmatpush1.msra.mxu0 %v328
      %778 = vmatprep.subr.mxu0 %v331
      %779 = vmatpush1.msra.mxu0 %v330
      %780 = vmatprep.subr.mxu0 %v333
      %781 = vmatpush1.msra.mxu0 %v332
      %782 = vmatprep.subr.mxu0 %v335
      %783 = vmatpush1.msra.mxu0 %v334
      %784 = vmatprep.subr.mxu0 %v337
      %785 = vmatpush1.msra.mxu0 %v336
      %786 = vmatprep.subr.mxu0 %v339
      %787 = vmatpush1.msra.mxu0 %v338
      %788 = vmatprep.subr.mxu0 %v341
      %789 = vmatpush1.msra.mxu0 %v340
      %790 = vmatprep.subr.mxu0 %v343
      %791 = vmatpush1.msra.mxu0 %v342
      %792 = vmatprep.subr.mxu0 %v345
      %793 = vmatpush1.msra.mxu0 %v344
      %794 = vmatprep.subr.mxu0 %v347
      %795 = vmatpush1.msra.mxu0 %v346
      %796 = vmatprep.subr.mxu0 %v349
      %797 = vmatpush1.msra.mxu0 %v348
      %798 = vmatprep.subr.mxu0 %v762
      %799 = vmatpush1.msra.mxu0 %v759
      %800 = vmatprep.subr.mxu0 0.0
      %801 = vmatpush1.msra.mxu0 0.0
      %802 = vmatprep.subr.mxu0 0.0
      %803 = vmatpush1.msra.mxu0 0.0
      %804 = vmatprep.subr.mxu0 0.0
      %805 = vmatpush1.msra.mxu0 0.0
      %806 = vmatprep.subr.mxu0 0.0
      %807 = vmatpush1.msra.mxu0 0.0
      %808 = vmatprep.subr.mxu0 0.0
      %809 = vmatpush1.msra.mxu0 0.0
      %810 = vmatprep.subr.mxu0 0.0
      %811 = vmatpush1.msra.mxu0 0.0
      %812 = vmatprep.subr.mxu0 0.0
      %813 = vmatpush1.msra.mxu0 0.0
      %814 = vmatprep.subr.mxu0 0.0
      %815 = vmatpush1.msra.mxu0 0.0
      %816 = vmatprep.subr.mxu0 0.0
      %817 = vmatpush1.msra.mxu0 0.0
      %818 = vmatprep.subr.mxu0 0.0
      %819 = vmatpush1.msra.mxu0 0.0
      %820 = vmatprep.subr.mxu0 0.0
      %821 = vmatpush1.msra.mxu0 0.0
      %822 = vmatprep.subr.mxu0 0.0
      %823 = vmatpush1.msra.mxu0 0.0
      %824 = vmatprep.subr.mxu0 0.0
      %825 = vmatpush1.msra.mxu0 0.0
      %826 = vmatprep.subr.mxu0 0.0
      %827 = vmatpush1.msra.mxu0 0.0
      %828 = vmatprep.mubr.f32.mxu0 %v750
      %829 = vmatmul.mubr.f32.gmra.mrb[0].mxu0 %v730
      %v830 = vpop.f32.mrb[0].mxu0
      %v831 = vadd.f32 0.0, %v830
      %v832 = vpop.f32.mrb[0].mxu0
      %v833 = vadd.f32 0.0, %v832
      %834 = vmatprep.mubr.f32.mxu0 %v752
      %835 = vmatmul.mubr.f32.gmra.mrb[0].mxu0 %v735
      %v836 = vpop.f32.mrb[0].mxu0
      %v837 = vadd.f32 0.0, %v836
      %v838 = vpop.f32.mrb[0].mxu0
      %v839 = vadd.f32 0.0, %v838
      %840 = vmatprep.mubr.f32.mxu0 %v754
      %841 = vmatmul.mubr.f32.gmra.mrb[0].mxu0 %v739
      %v842 = vpop.f32.mrb[0].mxu0
      %v843 = vadd.f32 0.0, %v842
      %v844 = vpop.f32.mrb[0].mxu0
      %v845 = vadd.f32 0.0, %v844
      %846 = vmatprep.mubr.f32.mxu0 %v756
      %847 = vmatmul.mubr.f32.gmra.mrb[0].mxu0 %v743
      %v848 = vpop.f32.mrb[0].mxu0
      %v849 = vadd.f32 0.0, %v848
      %v850 = vpop.f32.mrb[0].mxu0
      %v851 = vadd.f32 0.0, %v850
      %852 = vdwg.mxu0
      %v853 = vadd.f32 %v719, %v831
      %v854 = vadd.f32 %v720, %v833
      %v855 = vadd.f32 %v721, %v837
      %v856 = vadd.f32 %v722, %v839
      %v857 = vadd.f32 %v723, %v843
      %v858 = vadd.f32 %v724, %v845
      %v859 = vadd.f32 %v725, %v849
      %v860 = vadd.f32 %v726, %v851
      %v861 = vld [vmem:[%s2] sm:$0x3]
      %v863 = vlaneseq
      %v864 = vshrl.u32 %v863, 7
      %v865 = vsub.s32 0, %v864
      %v866 = vrot.slane %v861, %v865
      %v867 = vlaneseq
      %v868 = vshrl.u32 %v867, 7
      %v869 = vsub.s32 1, %v868
      %v870 = vrot.slane %v861, %v869
      %v873 = vmul.f32 %v853, %v866
      %v874 = vmul.f32 %v854, %v870
      %v875 = vmul.f32 %v855, %v866
      %v876 = vmul.f32 %v856, %v870
      %v877 = vmul.f32 %v857, %v866
      %v878 = vmul.f32 %v858, %v870
      %v879 = vmul.f32 %v859, %v866
      %v880 = vmul.f32 %v860, %v870
      %v881 = vld [vmem:[%s3] sm:$0x3]
      %v883 = vlaneseq
      %v884 = vshrl.u32 %v883, 7
      %v885 = vsub.s32 0, %v884
      %v886 = vrot.slane %v881, %v885
      %v887 = vlaneseq
      %v888 = vshrl.u32 %v887, 7
      %v889 = vsub.s32 1, %v888
      %v890 = vrot.slane %v881, %v889
      %v893 = vadd.f32 %v873, %v886
      %v894 = vadd.f32 %v874, %v890
      %v895 = vadd.f32 %v875, %v886
      %v896 = vadd.f32 %v876, %v890
      %v897 = vadd.f32 %v877, %v886
      %v898 = vadd.f32 %v878, %v890
      %v899 = vadd.f32 %v879, %v886
      %v900 = vadd.f32 %v880, %v890
      %v901 = vmax.f32 %v893, 0.0
      %v902 = vmax.f32 %v894, 0.0
      %v903 = vmax.f32 %v895, 0.0
      %v904 = vmax.f32 %v896, 0.0
      %v905 = vmax.f32 %v897, 0.0
      %v906 = vmax.f32 %v898, 0.0
      %v907 = vmax.f32 %v899, 0.0
      %v908 = vmax.f32 %v900, 0.0
      %909 = vst [vmem:[%s197] sm:$0xff] %v901
      %910 = vst [vmem:[%s197 + $0x8] sm:$0xff] %v902
      %911 = vst [vmem:[%s197 + $0x10] sm:$0xff] %v903
      %912 = vst [vmem:[%s197 + $0x18] sm:$0xff] %v904
      %913 = vst [vmem:[%s197 + $0x20] sm:$0xff] %v905
      %914 = vst [vmem:[%s197 + $0x28] sm:$0xff] %v906
      %915 = vst [vmem:[%s197 + $0x30] sm:$0xff] %v907
      %916 = vst [vmem:[%s197 + $0x38] sm:$0xff] %v908
      %p917 = scmp.lt.s32.totalorder %s15, 1
      %s918 = scalar_select %p917, %s15, 1
      %s919 = smul.addr %s918, 8
      %s920 = smul.addr %s919, 8
      %s921 = scalar_lea.vmem %s4, %s920
      // Predicated region
      $region37: #{conv2d_transpose_bn_relu.3} parent=35 // pred_check
        %p922 = pneg %p122
      $region38: #{conv2d_transpose_bn_relu.3} parent=35 // pred_check_branch
        %924 = sbr.rel (%p922) target = $region40
      $region39: #{conv2d_transpose_bn_relu.3} parent=35 // pred_region
        _
      $region40: #{conv2d_transpose_bn_relu.3} parent=35 // pred_fallthru
        _
    $region36: #{conv2d_transpose_bn_relu.3} parent=5 // pred_fallthru
      _
    %p925 = scmp.le.s32.totalorder 2, %s10
    // Predicated region
    $region41: #{conv2d_transpose_bn_relu.3} parent=5 // pred_check
      %p926 = pneg %p925
    $region42: #{conv2d_transpose_bn_relu.3} parent=5 // pred_check_branch
      %928 = sbr.rel (%p926) target = $region44
    $region43: #{conv2d_transpose_bn_relu.3} parent=5 // pred_region
      %s929 = ssub.s32 %s10, 2
      // Predicated region
      $region45: #{conv2d_transpose_bn_relu.3} parent=43 // pred_check
        %p930 = pneg %p128
      $region46: #{conv2d_transpose_bn_relu.3} parent=43 // pred_check_branch
        %932 = sbr.rel (%p930) target = $region48
      $region47: #{conv2d_transpose_bn_relu.3} parent=43 // pred_region
        %p933 = scmp.lt.s32.totalorder %s16, 1
        %s934 = scalar_select %p933, %s16, 1
        %s935 = smul.addr %s934, 8
        %s936 = smul.addr %s935, 8
        %s937 = scalar_lea.vmem %s4, %s936
      $region48: #{conv2d_transpose_bn_relu.3} parent=43 // pred_fallthru
        _
    $region44: #{conv2d_transpose_bn_relu.3} parent=5 // pred_fallthru
      _
  $region6: #{conv2d_transpose_bn_relu.3} parent=0 // loop_footer
    %s14 = sadd.s32 1, %s10
  $region7: #{conv2d_transpose_bn_relu.3} parent=0 // loop_footer_branch
    %9 = sbr.rel target = $region3
  $region8: #{conv2d_transpose_bn_relu.3} parent=0 // loop_exit
    _

</llo_original>
